<compile_context>
chip_gen: v7x
topology: tpu7x:2x2x1
jax: 0.10.0
libtpu: 0.0.40
codegen_flags: <defaults>
</compile_context>

<pallas_src>
import functools

import jax
import jax.numpy as jnp
from jax.experimental import pallas as pl
from jax.experimental.pallas import tpu as pltpu


def _round_up(v, m):
    return ((v + m - 1) // m) * m


def _vmem_capacity_bytes():
    """Physical VMEM per TensorCore, with a conservative fallback."""
    try:
        info = pltpu.get_tpu_info()
        for name in ("vmem_capacity_bytes", "vmem_size_bytes", "vmem_bytes"):
            v = getattr(info, name, None)
            if v:
                return int(v)
    except Exception:
        pass
    return 64 * 1024 * 1024  # v7x physical size; safe lower bound everywhere


def _ffn_kernel(x_ref, w1_ref, b1_ref, w2_ref, b2_ref, gamma_ref, beta_ref,
                o_ref, acc_ref, *, eps, inv_e, e_real, e_pad, needs_mask):
    # Grid: (row tiles [parallel], hidden chunks [arbitrary / reduction]).
    k = pl.program_id(1)
    nk = pl.num_programs(1)

    @pl.when(k == 0)
    def _():
        acc_ref[...] = jnp.zeros_like(acc_ref)

    x = x_ref[...]  # (tile_n, E_pad), native compute dtype

    # fc1 chunk + ReLU (MXU consumes native dtype, accumulates f32).
    h = jnp.dot(x, w1_ref[...], preferred_element_type=jnp.float32) + b1_ref[...]
    h = jnp.maximum(h, 0.0)

    # fc2 partial: accumulate into the f32 scratch across hidden chunks.
    acc_ref[...] += jnp.dot(h.astype(w2_ref.dtype), w2_ref[...],
                            preferred_element_type=jnp.float32)

    @pl.when(k == nk - 1)
    def _():
        # dropout (eval) = identity; residual add in f32.
        z = x.astype(jnp.float32) + acc_ref[...] + b2_ref[...]
        # Two-pass LayerNorm over the *real* embed dim.  Padded lanes of z are
        # exactly zero (weights/biases padded with zeros), so the sum is
        # correct; they are masked out of the variance after centering.
        mu = jnp.sum(z, axis=-1, keepdims=True) * inv_e
        c = z - mu
        if needs_mask:
            lane = jax.lax.broadcasted_iota(jnp.int32, (1, e_pad), 1)
            c = jnp.where(lane < e_real, c, 0.0)
        var = jnp.sum(c * c, axis=-1, keepdims=True) * inv_e
        zn = c * jax.lax.rsqrt(var + eps)
        # gamma/beta are zero in padded lanes -> padded output lanes stay zero.
        o_ref[...] = (zn * gamma_ref[...] + beta_ref[...]).astype(o_ref.dtype)


def ffn_forward(x, w1, b1, w2, b2, gamma, beta, *, tile_n=512, tile_h=None,
                eps=1e-5, compute_dtype=None):
    """FeedForwardNetwork.forward (inference).  x: (B, S, E); w1: (E, H);
    b1: (H,); w2: (H, E); b2/gamma/beta: (E,).  Returns (B, S, E) in x.dtype."""
    B, S, E = x.shape
    H = w1.shape[1]
    N = B * S

    out_dtype = x.dtype
    compute_dtype = jnp.dtype(compute_dtype if compute_dtype is not None else x.dtype)
    itemsize = compute_dtype.itemsize
    row_mult = 8 * max(1, 4 // itemsize)  # 8 (f32) / 16 (bf16) / 32 (int8/fp8)

    # Lane-dense feature dims (multiples of 128).
    E_pad = _round_up(E, 128)
    H_pad = _round_up(H, 128)

    # --- tile sizing --------------------------------------------------------
    vmem_budget = int(_vmem_capacity_bytes() * 0.85)  # headroom for compiler scratch

    tile_n = max(row_mult, min(tile_n, _round_up(N, row_mult)))
    tile_n = _round_up(tile_n, row_mult)
    tile_h = H_pad if tile_h is None else max(128, _round_up(min(tile_h, H_pad), 128))

    def _est(tn, th):
        n_chunks = -(-H_pad // th)
        w_buf = 1 if n_chunks == 1 else 2                # weights resident vs streamed
        return (w_buf * 2 * E_pad * th * itemsize        # w1 + w2 chunks
                + 4 * tn * E_pad * itemsize              # x + out tiles (dbl-buffered)
                + tn * E_pad * 4                         # f32 accumulator scratch
                + tn * th * 4                            # f32 hidden chunk
                + 4 * (w_buf * th + 3 * E_pad)           # biases / gamma / beta (f32)
                + (2 << 20))                             # slack

    while _est(tile_n, tile_h) > vmem_budget and tile_h > 128:
        tile_h = max(128, _round_up(tile_h // 2, 128))
    while _est(tile_n, tile_h) > vmem_budget and tile_n > row_mult:
        tile_n = max(row_mult, _round_up(tile_n // 2, row_mult))

    # Prefer >= 2 row tiles so the "parallel" axis can shard across the two
    # TensorCores on v7x.
    if _round_up(N, tile_n) // tile_n == 1 and tile_n >= 2 * row_mult:
        tile_n = _round_up(-(-tile_n // 2), row_mult)

    N_pad = _round_up(N, tile_n)
    num_tiles = N_pad // tile_n
    H_pad = _round_up(H_pad, tile_h)
    num_h_chunks = H_pad // tile_h
    resident = num_h_chunks == 1

    # --- operand padding / casting (elided when already aligned) ------------
    # NOTE: in a real model the padded / pre-cast parameters would be built
    # once at init, not per call.
    x2 = x.reshape(N, E).astype(compute_dtype)
    if N_pad != N or E_pad != E:
        x2 = jnp.zeros((N_pad, E_pad), compute_dtype).at[:N, :E].set(x2)

    w1p = w1.astype(compute_dtype)
    if (E_pad, H_pad) != tuple(w1.shape):
        w1p = jnp.zeros((E_pad, H_pad), compute_dtype).at[:E, :H].set(w1p)
    w2p = w2.astype(compute_dtype)
    if (H_pad, E_pad) != tuple(w2.shape):
        w2p = jnp.zeros((H_pad, E_pad), compute_dtype).at[:H, :E].set(w2p)

    def _pad_row(v, size, pad):
        v = v.reshape(1, size).astype(jnp.float32)
        if pad != size:
            v = jnp.zeros((1, pad), jnp.float32).at[:, :size].set(v)
        return v

    b1p = _pad_row(b1, H, H_pad)
    b2p = _pad_row(b2, E, E_pad)
    gp = _pad_row(gamma, E, E_pad)
    bp = _pad_row(beta, E, E_pad)

    # --- pallas_call ---------------------------------------------------------
    vmem_limit = int(min(max(2 * _est(tile_n, tile_h), 32 * 1024 * 1024), vmem_budget))

    cost = pl.CostEstimate(
        flops=int(4 * N_pad * E_pad * H_pad),
        transcendentals=int(N_pad),
        bytes_accessed=int(itemsize * (2 * N_pad * E_pad + 2 * E_pad * H_pad)
                           + 4 * (H_pad + 3 * E_pad)),
    )

    kernel = functools.partial(_ffn_kernel, eps=eps, inv_e=1.0 / E, e_real=E,
                               e_pad=E_pad, needs_mask=(E_pad != E))

    def _run(use_buffered):
        def spec(shape, imap, single):
            if single and use_buffered:
                # Constant index_map across the whole grid -> single buffer.
                return pl.BlockSpec(shape, imap, pipeline_mode=pl.Buffered(1))
            return pl.BlockSpec(shape, imap)

        call = pl.pallas_call(
            kernel,
            out_shape=jax.ShapeDtypeStruct((N_pad, E_pad), out_dtype),
            grid_spec=pltpu.PrefetchScalarGridSpec(
                num_scalar_prefetch=0,
                grid=(num_tiles, num_h_chunks),
                in_specs=[
                    spec((tile_n, E_pad), lambda i, k: (i, 0), False),     # x tile
                    spec((E_pad, tile_h), lambda i, k: (0, k), resident),  # w1 chunk
                    spec((1, tile_h), lambda i, k: (0, k), resident),      # b1 chunk
                    spec((tile_h, E_pad), lambda i, k: (k, 0), resident),  # w2 chunk
                    spec((1, E_pad), lambda i, k: (0, 0), True),           # b2
                    spec((1, E_pad), lambda i, k: (0, 0), True),           # gamma
                    spec((1, E_pad), lambda i, k: (0, 0), True),           # beta
                ],
                out_specs=pl.BlockSpec((tile_n, E_pad), lambda i, k: (i, 0)),
                scratch_shapes=[pltpu.VMEM((tile_n, E_pad), jnp.float32)],
            ),
            compiler_params=pltpu.CompilerParams(
                dimension_semantics=("parallel", "arbitrary"),
                vmem_limit_bytes=vmem_limit),
            cost_estimate=cost,
        )
        return call(x2, w1p, b1p, w2p, b2p, gp, bp)

    try:
        out = _run(use_buffered=True)
    except Exception:
        # Fallback if this runtime rejects pl.Buffered(1) single-buffering.
        out = _run(use_buffered=False)

    if N_pad != N or E_pad != E:
        out = out[:N, :E]
    return out.reshape(B, S, E)


def reference_ffn(x, w1, b1, w2, b2, gamma, beta, eps=1e-5):
    h = jnp.maximum(x @ w1 + b1[None, :], 0.0)
    y = h @ w2 + b2[None, :]
    z = x + y
    mu = jnp.mean(z, axis=-1, keepdims=True)
    var = jnp.mean((z - mu) ** 2, axis=-1, keepdims=True)
    return (z - mu) / jnp.sqrt(var + eps) * gamma[None, :] + beta[None, :]


if __name__ == "__main__":
    key = jax.random.PRNGKey(0)

    def make_params(k, E, H):
        k1, k2, k3, k4 = jax.random.split(k, 4)
        w1 = jax.random.normal(k1, (E, H), jnp.float32) * (1.0 / jnp.sqrt(E))
        b1 = jax.random.normal(k2, (H,), jnp.float32) * 0.01
        w2 = jax.random.normal(k3, (H, E), jnp.float32) * (1.0 / jnp.sqrt(H))
        b2 = jax.random.normal(k4, (E,), jnp.float32) * 0.01
        gamma = jnp.ones((E,), jnp.float32)
        beta = jnp.zeros((E,), jnp.float32)
        return w1, b1, w2, b2, gamma, beta

    # Case 1: module-scale config (batch=2, seq=8, embed_dim=32, hidden=64),
    # f32, weights fully resident (single hidden chunk, padded lanes masked).
    k0, k1, k2 = jax.random.split(key, 3)
    B, S, E, H = 2, 8, 32, 64
    x = jax.random.normal(k0, (B, S, E), jnp.float32)
    params = make_params(k1, E, H)
    out = jax.block_until_ready(ffn_forward(x, *params))
    ref = reference_ffn(x.reshape(-1, E), *params).reshape(B, S, E)
    assert jnp.allclose(out, ref, atol=1e-4, rtol=1e-4), "case1 mismatch vs reference"

    # Case 2: lane-aligned dims with the hidden dim streamed in two chunks
    # (exercises the accumulator / reduction-axis path).
    B2, S2, E2, H2 = 2, 24, 128, 256
    x_big = jax.random.normal(k2, (B2, S2, E2), jnp.float32)
    params2 = make_params(jax.random.fold_in(key, 7), E2, H2)
    out2 = jax.block_until_ready(ffn_forward(x_big, *params2, tile_h=128))
    ref2 = reference_ffn(x_big.reshape(-1, E2), *params2).reshape(B2, S2, E2)
    assert jnp.allclose(out2, ref2, atol=1e-4, rtol=1e-4), "case2 mismatch vs reference"

    # Case 3: bf16 MXU compute path with f32 accumulation (loose tolerance
    # against the all-f32 reference, as expected for mixed precision).
    out3 = jax.block_until_ready(ffn_forward(x, *params, compute_dtype=jnp.bfloat16))
    assert jnp.allclose(out3, ref, atol=0.1, rtol=0.1), "case3 mismatch vs reference"

    print("KERNEL_OK")
</pallas_src>

<mosaic_0001>
module attributes {stable_mosaic.version = 11 : i64} {
  func.func @_ffn_kernel(%arg0: i32, %arg1: i32, %arg2: memref<8x128xf32, #tpu.memory_space<vmem>>, %arg3: memref<128x128xf32, #tpu.memory_space<vmem>>, %arg4: memref<1x128xf32, #tpu.memory_space<vmem>>, %arg5: memref<128x128xf32, #tpu.memory_space<vmem>>, %arg6: memref<1x128xf32, #tpu.memory_space<vmem>>, %arg7: memref<1x128xf32, #tpu.memory_space<vmem>>, %arg8: memref<1x128xf32, #tpu.memory_space<vmem>>, %arg9: memref<8x128xf32, #tpu.memory_space<vmem>>, %arg10: memref<8x128xf32, #tpu.memory_space<vmem>>) attributes {dimension_semantics = [#tpu.dimension_semantics<parallel>, #tpu.dimension_semantics<arbitrary>], iteration_bounds = array<i64: 2, 1>, scalar_prefetch = 0 : i64, scratch_operands = 1 : i64, tpu.core_type = #tpu.core_type<tc>, window_params = [{transform_indices = @transform_0, window_bounds = array<i64: 8, 128>}, {pipeline_mode = #tpu.pipeline_mode<synchronous>, transform_indices = @transform_1, window_bounds = array<i64: 128, 128>}, {pipeline_mode = #tpu.pipeline_mode<synchronous>, transform_indices = @transform_2, window_bounds = array<i64: 1, 128>}, {pipeline_mode = #tpu.pipeline_mode<synchronous>, transform_indices = @transform_3, window_bounds = array<i64: 128, 128>}, {pipeline_mode = #tpu.pipeline_mode<synchronous>, transform_indices = @transform_4, window_bounds = array<i64: 1, 128>}, {pipeline_mode = #tpu.pipeline_mode<synchronous>, transform_indices = @transform_5, window_bounds = array<i64: 1, 128>}, {pipeline_mode = #tpu.pipeline_mode<synchronous>, transform_indices = @transform_6, window_bounds = array<i64: 1, 128>}, {transform_indices = @transform_7, window_bounds = array<i64: 8, 128>}]} {
    %c0_i32 = arith.constant 0 : i32
    %0 = arith.cmpi eq, %arg1, %c0_i32 : i32
    %1 = arith.extui %0 : i1 to i32
    %c0_i32_0 = arith.constant 0 : i32
    %2 = arith.cmpi ne, %1, %c0_i32_0 : i32
    scf.if %2 {
      %cst_16 = arith.constant 0.000000e+00 : f32
      %19 = vector.broadcast %cst_16 : f32 to vector<8x128xf32>
      %c0_17 = arith.constant 0 : index
      %c0_18 = arith.constant 0 : index
      %20 = vector.load %arg10[%c0_17, %c0_18] : memref<8x128xf32, #tpu.memory_space<vmem>>, vector<8x128xf32>
      tpu.vector_store %arg10[%c0_17, %c0_18], %19 {strides = array<i32>} : memref<8x128xf32, #tpu.memory_space<vmem>>, vector<8x128xf32>,
    } else {
    }
    %c0 = arith.constant 0 : index
    %c0_1 = arith.constant 0 : index
    %3 = vector.load %arg2[%c0, %c0_1] : memref<8x128xf32, #tpu.memory_space<vmem>>, vector<8x128xf32>
    %c0_2 = arith.constant 0 : index
    %c0_3 = arith.constant 0 : index
    %4 = vector.load %arg3[%c0_2, %c0_3] : memref<128x128xf32, #tpu.memory_space<vmem>>, vector<128x128xf32>
    %cst = arith.constant dense<0.000000e+00> : vector<8x128xf32>
    %5 = tpu.matmul %3, %4, %cst {dimension_numbers = #tpu.dot_dimension_numbers<[1], [0], [0], [1], [0, 0, 1, 1], [], []>} : vector<8x128xf32>, vector<128x128xf32>, vector<8x128xf32> -> vector<8x128xf32>
    %c0_4 = arith.constant 0 : index
    %c0_5 = arith.constant 0 : index
    %6 = vector.load %arg4[%c0_4, %c0_5] : memref<1x128xf32, #tpu.memory_space<vmem>>, vector<1x128xf32>
    %7 = vector.broadcast %6 : vector<1x128xf32> to vector<8x128xf32>
    %8 = arith.addf %5, %7 : vector<8x128xf32>
    %cst_6 = arith.constant 0.000000e+00 : f32
    %9 = vector.broadcast %cst_6 : f32 to vector<8x128xf32>
    %10 = arith.maximumf %8, %9 : vector<8x128xf32>
    %c0_7 = arith.constant 0 : index
    %c0_8 = arith.constant 0 : index
    %11 = vector.load %arg10[%c0_7, %c0_8] : memref<8x128xf32, #tpu.memory_space<vmem>>, vector<8x128xf32>
    %c0_9 = arith.constant 0 : index
    %c0_10 = arith.constant 0 : index
    %12 = vector.load %arg5[%c0_9, %c0_10] : memref<128x128xf32, #tpu.memory_space<vmem>>, vector<128x128xf32>
    %cst_11 = arith.constant dense<0.000000e+00> : vector<8x128xf32>
    %13 = tpu.matmul %10, %12, %cst_11 {dimension_numbers = #tpu.dot_dimension_numbers<[1], [0], [0], [1], [0, 0, 1, 1], [], []>} : vector<8x128xf32>, vector<128x128xf32>, vector<8x128xf32> -> vector<8x128xf32>
    %14 = arith.addf %11, %13 : vector<8x128xf32>
    %c0_12 = arith.constant 0 : index
    %c0_13 = arith.constant 0 : index
    %15 = vector.load %arg10[%c0_12, %c0_13] : memref<8x128xf32, #tpu.memory_space<vmem>>, vector<8x128xf32>
    tpu.vector_store %arg10[%c0_12, %c0_13], %14 {strides = array<i32>} : memref<8x128xf32, #tpu.memory_space<vmem>>, vector<8x128xf32>,
    %c0_i32_14 = arith.constant 0 : i32
    %16 = arith.cmpi eq, %arg1, %c0_i32_14 : i32
    %17 = arith.extui %16 : i1 to i32
    %c0_i32_15 = arith.constant 0 : i32
    %18 = arith.cmpi ne, %17, %c0_i32_15 : i32
    scf.if %18 {
      %c0_16 = arith.constant 0 : index
      %c0_17 = arith.constant 0 : index
      %19 = vector.load %arg10[%c0_16, %c0_17] : memref<8x128xf32, #tpu.memory_space<vmem>>, vector<8x128xf32>
      %20 = arith.addf %3, %19 : vector<8x128xf32>
      %c0_18 = arith.constant 0 : index
      %c0_19 = arith.constant 0 : index
      %21 = vector.load %arg6[%c0_18, %c0_19] : memref<1x128xf32, #tpu.memory_space<vmem>>, vector<1x128xf32>
      %22 = vector.broadcast %21 : vector<1x128xf32> to vector<8x128xf32>
      %23 = arith.addf %20, %22 : vector<8x128xf32>
      %cst_20 = arith.constant dense<0.000000e+00> : vector<8xf32>
      %24 = vector.multi_reduction <add>, %23, %cst_20 [1] : vector<8x128xf32> to vector<8xf32>
      %25 = vector.shape_cast %24 : vector<8xf32> to vector<8x1xf32>
      %cst_21 = arith.constant 3.125000e-02 : f32
      %26 = vector.broadcast %cst_21 : f32 to vector<8x1xf32>
      %27 = arith.mulf %25, %26 : vector<8x1xf32>
      %28 = vector.broadcast %27 : vector<8x1xf32> to vector<8x128xf32>
      %29 = arith.subf %23, %28 : vector<8x128xf32>
      %30 = tpu.iota {dimensions = array<i32: 1>} : vector<1x128xi32>
      %c32_i32 = arith.constant 32 : i32
      %31 = vector.broadcast %c32_i32 : i32 to vector<1x128xi32>
      %32 = arith.cmpi slt, %30, %31 : vector<1x128xi32>
      %cst_22 = arith.constant 0.000000e+00 : f32
      %33 = vector.shape_cast %32 : vector<1x128xi1> to vector<1x128xi1>
      %34 = vector.broadcast %33 : vector<1x128xi1> to vector<8x128xi1>
      %35 = vector.broadcast %cst_22 : f32 to vector<8x128xf32>
      %36 = arith.select %34, %29, %35 : vector<8x128xi1>, vector<8x128xf32>
      %37 = arith.mulf %36, %36 : vector<8x128xf32>
      %cst_23 = arith.constant dense<0.000000e+00> : vector<8xf32>
      %38 = vector.multi_reduction <add>, %37, %cst_23 [1] : vector<8x128xf32> to vector<8xf32>
      %39 = vector.shape_cast %38 : vector<8xf32> to vector<8x1xf32>
      %cst_24 = arith.constant 3.125000e-02 : f32
      %40 = vector.broadcast %cst_24 : f32 to vector<8x1xf32>
      %41 = arith.mulf %39, %40 : vector<8x1xf32>
      %cst_25 = arith.constant 9.99999974E-6 : f32
      %42 = vector.broadcast %cst_25 : f32 to vector<8x1xf32>
      %43 = arith.addf %41, %42 : vector<8x1xf32>
      %44 = math.rsqrt %43 : vector<8x1xf32>
      %45 = vector.broadcast %44 : vector<8x1xf32> to vector<8x128xf32>
      %46 = arith.mulf %36, %45 : vector<8x128xf32>
      %c0_26 = arith.constant 0 : index
      %c0_27 = arith.constant 0 : index
      %47 = vector.load %arg7[%c0_26, %c0_27] : memref<1x128xf32, #tpu.memory_space<vmem>>, vector<1x128xf32>
      %48 = vector.broadcast %47 : vector<1x128xf32> to vector<8x128xf32>
      %49 = arith.mulf %46, %48 : vector<8x128xf32>
      %c0_28 = arith.constant 0 : index
      %c0_29 = arith.constant 0 : index
      %50 = vector.load %arg8[%c0_28, %c0_29] : memref<1x128xf32, #tpu.memory_space<vmem>>, vector<1x128xf32>
      %51 = vector.broadcast %50 : vector<1x128xf32> to vector<8x128xf32>
      %52 = arith.addf %49, %51 : vector<8x128xf32>
      %c0_30 = arith.constant 0 : index
      %c0_31 = arith.constant 0 : index
      %53 = vector.load %arg9[%c0_30, %c0_31] : memref<8x128xf32, #tpu.memory_space<vmem>>, vector<8x128xf32>
      tpu.vector_store %arg9[%c0_30, %c0_31], %52 {strides = array<i32>} : memref<8x128xf32, #tpu.memory_space<vmem>>, vector<8x128xf32>,
    } else {
    }
    return
  }
  func.func @transform_0(%arg0: i32, %arg1: i32) -> (i32, i32) {
    %c0_i32 = arith.constant 0 : i32
    %c0_i32_0 = arith.constant 0 : i32
    return %arg0, %c0_i32 : i32, i32
  }
  func.func @transform_1(%arg0: i32, %arg1: i32) -> (i32, i32) {
    %c0_i32 = arith.constant 0 : i32
    %c0_i32_0 = arith.constant 0 : i32
    return %c0_i32, %arg1 : i32, i32
  }
  func.func @transform_2(%arg0: i32, %arg1: i32) -> (i32, i32) {
    %c0_i32 = arith.constant 0 : i32
    %c0_i32_0 = arith.constant 0 : i32
    return %c0_i32, %arg1 : i32, i32
  }
  func.func @transform_3(%arg0: i32, %arg1: i32) -> (i32, i32) {
    %c0_i32 = arith.constant 0 : i32
    %c0_i32_0 = arith.constant 0 : i32
    return %arg1, %c0_i32 : i32, i32
  }
  func.func @transform_4(%arg0: i32, %arg1: i32) -> (i32, i32) {
    %c0_i32 = arith.constant 0 : i32
    %c0_i32_0 = arith.constant 0 : i32
    %c0_i32_1 = arith.constant 0 : i32
    return %c0_i32, %c0_i32_0 : i32, i32
  }
  func.func @transform_5(%arg0: i32, %arg1: i32) -> (i32, i32) {
    %c0_i32 = arith.constant 0 : i32
    %c0_i32_0 = arith.constant 0 : i32
    %c0_i32_1 = arith.constant 0 : i32
    return %c0_i32, %c0_i32_0 : i32, i32
  }
  func.func @transform_6(%arg0: i32, %arg1: i32) -> (i32, i32) {
    %c0_i32 = arith.constant 0 : i32
    %c0_i32_0 = arith.constant 0 : i32
    %c0_i32_1 = arith.constant 0 : i32
    return %c0_i32, %c0_i32_0 : i32, i32
  }
  func.func @transform_7(%arg0: i32, %arg1: i32) -> (i32, i32) {
    %c0_i32 = arith.constant 0 : i32
    %c0_i32_0 = arith.constant 0 : i32
    return %arg0, %c0_i32 : i32, i32
  }
}

module attributes {stable_mosaic.version = 11 : i64} {
  func.func @_ffn_kernel(%arg0: i32, %arg1: i32, %arg2: memref<8x128xf32, #tpu.memory_space<vmem>>, %arg3: memref<128x128xf32, #tpu.memory_space<vmem>>, %arg4: memref<1x128xf32, #tpu.memory_space<vmem>>, %arg5: memref<128x128xf32, #tpu.memory_space<vmem>>, %arg6: memref<1x128xf32, #tpu.memory_space<vmem>>, %arg7: memref<1x128xf32, #tpu.memory_space<vmem>>, %arg8: memref<1x128xf32, #tpu.memory_space<vmem>>, %arg9: memref<8x128xf32, #tpu.memory_space<vmem>>, %arg10: memref<8x128xf32, #tpu.memory_space<vmem>>) attributes {dimension_semantics = [#tpu.dimension_semantics<parallel>, #tpu.dimension_semantics<arbitrary>], iteration_bounds = array<i64: 2, 1>, scalar_prefetch = 0 : i64, scratch_operands = 1 : i64, tpu.core_type = #tpu.core_type<tc>, window_params = [{transform_indices = @transform_0, window_bounds = array<i64: 8, 128>}, {transform_indices = @transform_1, window_bounds = array<i64: 128, 128>}, {transform_indices = @transform_2, window_bounds = array<i64: 1, 128>}, {transform_indices = @transform_3, window_bounds = array<i64: 128, 128>}, {pipeline_mode = #tpu.pipeline_mode<synchronous>, transform_indices = @transform_4, window_bounds = array<i64: 1, 128>}, {pipeline_mode = #tpu.pipeline_mode<synchronous>, transform_indices = @transform_5, window_bounds = array<i64: 1, 128>}, {pipeline_mode = #tpu.pipeline_mode<synchronous>, transform_indices = @transform_6, window_bounds = array<i64: 1, 128>}, {transform_indices = @transform_7, window_bounds = array<i64: 8, 128>}]} {
    %c0_i32 = arith.constant 0 : i32
    %0 = arith.cmpi eq, %arg1, %c0_i32 : i32
    %1 = arith.extui %0 : i1 to i32
    %c0_i32_0 = arith.constant 0 : i32
    %2 = arith.cmpi ne, %1, %c0_i32_0 : i32
    scf.if %2 {
      %cst_16 = arith.constant 0.000000e+00 : f32
      %19 = vector.broadcast %cst_16 : f32 to vector<8x128xf32>
      %c0_17 = arith.constant 0 : index
      %c0_18 = arith.constant 0 : index
      %20 = vector.load %arg10[%c0_17, %c0_18] : memref<8x128xf32, #tpu.memory_space<vmem>>, vector<8x128xf32>
      tpu.vector_store %arg10[%c0_17, %c0_18], %19 {strides = array<i32>} : memref<8x128xf32, #tpu.memory_space<vmem>>, vector<8x128xf32>,
    } else {
    }
    %c0 = arith.constant 0 : index
    %c0_1 = arith.constant 0 : index
    %3 = vector.load %arg2[%c0, %c0_1] : memref<8x128xf32, #tpu.memory_space<vmem>>, vector<8x128xf32>
    %c0_2 = arith.constant 0 : index
    %c0_3 = arith.constant 0 : index
    %4 = vector.load %arg3[%c0_2, %c0_3] : memref<128x128xf32, #tpu.memory_space<vmem>>, vector<128x128xf32>
    %cst = arith.constant dense<0.000000e+00> : vector<8x128xf32>
    %5 = tpu.matmul %3, %4, %cst {dimension_numbers = #tpu.dot_dimension_numbers<[1], [0], [0], [1], [0, 0, 1, 1], [], []>} : vector<8x128xf32>, vector<128x128xf32>, vector<8x128xf32> -> vector<8x128xf32>
    %c0_4 = arith.constant 0 : index
    %c0_5 = arith.constant 0 : index
    %6 = vector.load %arg4[%c0_4, %c0_5] : memref<1x128xf32, #tpu.memory_space<vmem>>, vector<1x128xf32>
    %7 = vector.broadcast %6 : vector<1x128xf32> to vector<8x128xf32>
    %8 = arith.addf %5, %7 : vector<8x128xf32>
    %cst_6 = arith.constant 0.000000e+00 : f32
    %9 = vector.broadcast %cst_6 : f32 to vector<8x128xf32>
    %10 = arith.maximumf %8, %9 : vector<8x128xf32>
    %c0_7 = arith.constant 0 : index
    %c0_8 = arith.constant 0 : index
    %11 = vector.load %arg10[%c0_7, %c0_8] : memref<8x128xf32, #tpu.memory_space<vmem>>, vector<8x128xf32>
    %c0_9 = arith.constant 0 : index
    %c0_10 = arith.constant 0 : index
    %12 = vector.load %arg5[%c0_9, %c0_10] : memref<128x128xf32, #tpu.memory_space<vmem>>, vector<128x128xf32>
    %cst_11 = arith.constant dense<0.000000e+00> : vector<8x128xf32>
    %13 = tpu.matmul %10, %12, %cst_11 {dimension_numbers = #tpu.dot_dimension_numbers<[1], [0], [0], [1], [0, 0, 1, 1], [], []>} : vector<8x128xf32>, vector<128x128xf32>, vector<8x128xf32> -> vector<8x128xf32>
    %14 = arith.addf %11, %13 : vector<8x128xf32>
    %c0_12 = arith.constant 0 : index
    %c0_13 = arith.constant 0 : index
    %15 = vector.load %arg10[%c0_12, %c0_13] : memref<8x128xf32, #tpu.memory_space<vmem>>, vector<8x128xf32>
    tpu.vector_store %arg10[%c0_12, %c0_13], %14 {strides = array<i32>} : memref<8x128xf32, #tpu.memory_space<vmem>>, vector<8x128xf32>,
    %c0_i32_14 = arith.constant 0 : i32
    %16 = arith.cmpi eq, %arg1, %c0_i32_14 : i32
    %17 = arith.extui %16 : i1 to i32
    %c0_i32_15 = arith.constant 0 : i32
    %18 = arith.cmpi ne, %17, %c0_i32_15 : i32
    scf.if %18 {
      %c0_16 = arith.constant 0 : index
      %c0_17 = arith.constant 0 : index
      %19 = vector.load %arg10[%c0_16, %c0_17] : memref<8x128xf32, #tpu.memory_space<vmem>>, vector<8x128xf32>
      %20 = arith.addf %3, %19 : vector<8x128xf32>
      %c0_18 = arith.constant 0 : index
      %c0_19 = arith.constant 0 : index
      %21 = vector.load %arg6[%c0_18, %c0_19] : memref<1x128xf32, #tpu.memory_space<vmem>>, vector<1x128xf32>
      %22 = vector.broadcast %21 : vector<1x128xf32> to vector<8x128xf32>
      %23 = arith.addf %20, %22 : vector<8x128xf32>
      %cst_20 = arith.constant dense<0.000000e+00> : vector<8xf32>
      %24 = vector.multi_reduction <add>, %23, %cst_20 [1] : vector<8x128xf32> to vector<8xf32>
      %25 = vector.shape_cast %24 : vector<8xf32> to vector<8x1xf32>
      %cst_21 = arith.constant 3.125000e-02 : f32
      %26 = vector.broadcast %cst_21 : f32 to vector<8x1xf32>
      %27 = arith.mulf %25, %26 : vector<8x1xf32>
      %28 = vector.broadcast %27 : vector<8x1xf32> to vector<8x128xf32>
      %29 = arith.subf %23, %28 : vector<8x128xf32>
      %30 = tpu.iota {dimensions = array<i32: 1>} : vector<1x128xi32>
      %c32_i32 = arith.constant 32 : i32
      %31 = vector.broadcast %c32_i32 : i32 to vector<1x128xi32>
      %32 = arith.cmpi slt, %30, %31 : vector<1x128xi32>
      %cst_22 = arith.constant 0.000000e+00 : f32
      %33 = vector.shape_cast %32 : vector<1x128xi1> to vector<1x128xi1>
      %34 = vector.broadcast %33 : vector<1x128xi1> to vector<8x128xi1>
      %35 = vector.broadcast %cst_22 : f32 to vector<8x128xf32>
      %36 = arith.select %34, %29, %35 : vector<8x128xi1>, vector<8x128xf32>
      %37 = arith.mulf %36, %36 : vector<8x128xf32>
      %cst_23 = arith.constant dense<0.000000e+00> : vector<8xf32>
      %38 = vector.multi_reduction <add>, %37, %cst_23 [1] : vector<8x128xf32> to vector<8xf32>
      %39 = vector.shape_cast %38 : vector<8xf32> to vector<8x1xf32>
      %cst_24 = arith.constant 3.125000e-02 : f32
      %40 = vector.broadcast %cst_24 : f32 to vector<8x1xf32>
      %41 = arith.mulf %39, %40 : vector<8x1xf32>
      %cst_25 = arith.constant 9.99999974E-6 : f32
      %42 = vector.broadcast %cst_25 : f32 to vector<8x1xf32>
      %43 = arith.addf %41, %42 : vector<8x1xf32>
      %44 = math.rsqrt %43 : vector<8x1xf32>
      %45 = vector.broadcast %44 : vector<8x1xf32> to vector<8x128xf32>
      %46 = arith.mulf %36, %45 : vector<8x128xf32>
      %c0_26 = arith.constant 0 : index
      %c0_27 = arith.constant 0 : index
      %47 = vector.load %arg7[%c0_26, %c0_27] : memref<1x128xf32, #tpu.memory_space<vmem>>, vector<1x128xf32>
      %48 = vector.broadcast %47 : vector<1x128xf32> to vector<8x128xf32>
      %49 = arith.mulf %46, %48 : vector<8x128xf32>
      %c0_28 = arith.constant 0 : index
      %c0_29 = arith.constant 0 : index
      %50 = vector.load %arg8[%c0_28, %c0_29] : memref<1x128xf32, #tpu.memory_space<vmem>>, vector<1x128xf32>
      %51 = vector.broadcast %50 : vector<1x128xf32> to vector<8x128xf32>
      %52 = arith.addf %49, %51 : vector<8x128xf32>
      %c0_30 = arith.constant 0 : index
      %c0_31 = arith.constant 0 : index
      %53 = vector.load %arg9[%c0_30, %c0_31] : memref<8x128xf32, #tpu.memory_space<vmem>>, vector<8x128xf32>
      tpu.vector_store %arg9[%c0_30, %c0_31], %52 {strides = array<i32>} : memref<8x128xf32, #tpu.memory_space<vmem>>, vector<8x128xf32>,
    } else {
    }
    return
  }
  func.func @transform_0(%arg0: i32, %arg1: i32) -> (i32, i32) {
    %c0_i32 = arith.constant 0 : i32
    %c0_i32_0 = arith.constant 0 : i32
    return %arg0, %c0_i32 : i32, i32
  }
  func.func @transform_1(%arg0: i32, %arg1: i32) -> (i32, i32) {
    %c0_i32 = arith.constant 0 : i32
    %c0_i32_0 = arith.constant 0 : i32
    return %c0_i32, %arg1 : i32, i32
  }
  func.func @transform_2(%arg0: i32, %arg1: i32) -> (i32, i32) {
    %c0_i32 = arith.constant 0 : i32
    %c0_i32_0 = arith.constant 0 : i32
    return %c0_i32, %arg1 : i32, i32
  }
  func.func @transform_3(%arg0: i32, %arg1: i32) -> (i32, i32) {
    %c0_i32 = arith.constant 0 : i32
    %c0_i32_0 = arith.constant 0 : i32
    return %arg1, %c0_i32 : i32, i32
  }
  func.func @transform_4(%arg0: i32, %arg1: i32) -> (i32, i32) {
    %c0_i32 = arith.constant 0 : i32
    %c0_i32_0 = arith.constant 0 : i32
    %c0_i32_1 = arith.constant 0 : i32
    return %c0_i32, %c0_i32_0 : i32, i32
  }
  func.func @transform_5(%arg0: i32, %arg1: i32) -> (i32, i32) {
    %c0_i32 = arith.constant 0 : i32
    %c0_i32_0 = arith.constant 0 : i32
    %c0_i32_1 = arith.constant 0 : i32
    return %c0_i32, %c0_i32_0 : i32, i32
  }
  func.func @transform_6(%arg0: i32, %arg1: i32) -> (i32, i32) {
    %c0_i32 = arith.constant 0 : i32
    %c0_i32_0 = arith.constant 0 : i32
    %c0_i32_1 = arith.constant 0 : i32
    return %c0_i32, %c0_i32_0 : i32, i32
  }
  func.func @transform_7(%arg0: i32, %arg1: i32) -> (i32, i32) {
    %c0_i32 = arith.constant 0 : i32
    %c0_i32_0 = arith.constant 0 : i32
    return %arg0, %c0_i32 : i32, i32
  }
}

</mosaic_0001>

<llo_original>
// kernel: tpu_custom_call.1
$region0: #{tpu_custom_call.1}
  #allocation0 [shape = 'u32[]', space=smem, size = 0x4, offset = 0x4, fixed_abs, tag = 'smem constant byte address 0x4 - core index']
  #allocation1 [shape = 'u32[144,128]{1,0:T(1,128)}', space=vmem, size = 0x12000, scoped, tag = 'internal scratch']
  #allocation2 [shape = 'f32[8,128]{1,0:T(8,128)}', space=vmem, size = 0x1000, scoped, tag = 'scratch operand']
  %s0 = inlined_call_operand.hbm [shape: f32[16,128], index: 0, kind: input, shape index: {}]
  %s1 = inlined_call_operand.hbm [shape: f32[128,128], index: 1, kind: input, shape index: {}]
  %s2 = inlined_call_operand.vmem [shape: f32[1,128], index: 2, kind: input, shape index: {}]
  %s3 = inlined_call_operand.hbm [shape: f32[128,128], index: 3, kind: input, shape index: {}]
  %s4 = inlined_call_operand.vmem [shape: f32[1,128], index: 4, kind: input, shape index: {}]
  %s5 = inlined_call_operand.vmem [shape: f32[1,128], index: 5, kind: input, shape index: {}]
  %s6 = inlined_call_operand.vmem [shape: f32[1,128], index: 6, kind: input, shape index: {}]
  %s7 = inlined_call_operand.hbm [shape: f32[16,128], index: 7, kind: output, shape index: {}]
  %s8 = sld [smem:[#allocation0]]
  $region81: #{tpu_custom_call.1} parent=0
    _
  %s10 = ssub.s32 1, %s8
  %s11 = scalar_select 0, %s10, %s8
  $region1: #{tpu_custom_call.1} parent=0
    #allocation3 [shape = 'u8[8192]{0}', space=vmem, size = 0x2000, scoped, tag = 'input window, operand 0']
    #allocation4 [shape = 's32[2]{0}', space=sflag, size = 0x8, scoped, tag = 'scoped memory for tpu_custom_call.1']
    #allocation5 [shape = 's32[2]{0}', space=sflag, size = 0x8, scoped, tag = 'scoped memory for tpu_custom_call.1']
    #allocation6 [shape = 'u8[65536]{0}', space=vmem, size = 0x10000, scoped, tag = 'input window, operand 1, single buffered']
    #allocation7 [shape = 's32[1]{0}', space=sflag, size = 0x4, scoped, tag = 'scoped memory for tpu_custom_call.1']
    #allocation8 [shape = 'u8[65536]{0}', space=vmem, size = 0x10000, scoped, tag = 'input window, operand 3, single buffered']
    #allocation9 [shape = 'u8[8192]{0}', space=vmem, size = 0x2000, scoped, tag = 'output window, operand 0']
    %12 = vsyncpa [#allocation4], 0
    %s13 = scalar_lea.sflag [#allocation4], 1
    %14 = vsyncpa %s13, 0
    %15 = vsyncpa [#allocation7], 0
    %16 = vsyncpa [#allocation5], 0
    %s17 = scalar_lea.sflag [#allocation5], 1
    %18 = vsyncpa %s17, 0
    loop: start=0, step=1, limit=4
    $region2: #{tpu_custom_call.1} parent=1 // loop_pre_header
      _
    $region3: #{tpu_custom_call.1} parent=1 // loop_header
      %s20 = sphi 0, %s24
      %p21 = scmp.ge.s32.totalorder %s20, 4
      %s27 = sphi 0, %s39
      %s28 = sphi 0, %s35
      %s29 = sphi 0, %s27
      %s30 = sphi 0, %s28
      %s31 = sphi 0, %s29
      %s32 = sphi 0, %s30
      %s42 = sphi 0, %s44
      %s45 = sphi 0, %s42
      %s46 = sphi 0, %s45
      %s62 = sphi 0, %s46
      %s68 = sphi 0, %s70
      %s71 = sphi 0, %s68
      %s72 = sphi 0, %s71
      %s88 = sphi 0, %s72
      %s94 = sphi 0, %s96
      %s97 = sphi 0, %s94
      %s98 = sphi 0, %s97
      %s114 = sphi 0, %s98
      %s120 = sphi 0, %s122
      %s123 = sphi 0, %s120
      %s124 = sphi 0, %s123
      %s140 = sphi 0, %s124
      %s144 = sphi 0, %s144
      %s146 = sphi 0, %s144
      %s147 = sphi 0, %s146
      %s161 = sphi 0, %s147
      %s165 = sphi 0, %s165
      %s167 = sphi 0, %s165
      %s168 = sphi 0, %s167
      %s182 = sphi 0, %s168
      %s186 = sphi 0, %s186
      %s188 = sphi 0, %s186
      %s189 = sphi 0, %s188
      %s203 = sphi 0, %s189
      %s209 = sphi 0, %s211
      %s212 = sphi 0, %s209
      %s213 = sphi 0, %s212
      %s229 = sphi 0, %s213
    $region4: #{tpu_custom_call.1} parent=1 // loop_header_branch
      %23 = sbr.rel (%p21) target = $region8
    $region5: #{tpu_custom_call.1} parent=1 // loop_body
      %s25 = ssub.s32 %s20, 1
      %s26 = ssub.s32 %s20, 2
      %s33 = sadd.s32 1, %s28
      %p34 = scmp.ge.s32.totalorder %s33, 1
      %s35 = scalar_select %p34, 0, %s33
      %s36 = sadd.s32 1, %s27
      %s37 = scalar_select %p34, %s36, %s27
      %p38 = scmp.ge.s32.totalorder %s37, 2
      %s39 = scalar_select %p38, 0, %s37
      %s40 = ssub.s32 %s27, %s39
      %p41 = scmp.eq.s32.totalorder %s40, 0
      %s43 = sadd.s32 %s42, 1
      %s44 = scalar_select %p41, %s42, %s43
      %p47 = pneg %p41
      %p48 = scmp.eq.s32.totalorder %s20, 1
      %p49 = por %p47, %p48
      %p50 = scmp.ne.s32.totalorder %s42, %s45
      %p51 = scmp.eq.s32.totalorder %s20, 0
      %p52 = por %p50, %p51
      %p53 = scmp.ne.s32.totalorder %s42, %s45
      %p54 = scmp.eq.s32.totalorder %s25, 1
      %p55 = por %p53, %p54
      %p56 = scmp.ne.s32.totalorder %s45, %s46
      %p57 = scmp.eq.s32.totalorder %s25, 0
      %p58 = por %p56, %p57
      %p59 = scmp.ne.s32.totalorder %s45, %s46
      %p60 = scmp.eq.s32.totalorder %s26, 1
      %p61 = por %p59, %p60
      %p63 = scmp.ne.s32.totalorder %s46, %s62
      %p64 = scmp.eq.s32.totalorder %s26, 0
      %p65 = por %p63, %p64
      %s66 = ssub.s32 %s28, %s35
      %p67 = scmp.eq.s32.totalorder %s66, 0
      %s69 = sadd.s32 %s68, 1
      %s70 = scalar_select %p67, %s68, %s69
      %p73 = pneg %p67
      %p74 = scmp.eq.s32.totalorder %s20, 1
      %p75 = por %p73, %p74
      %p76 = scmp.ne.s32.totalorder %s68, %s71
      %p77 = scmp.eq.s32.totalorder %s20, 0
      %p78 = por %p76, %p77
      %p79 = scmp.ne.s32.totalorder %s68, %s71
      %p80 = scmp.eq.s32.totalorder %s25, 1
      %p81 = por %p79, %p80
      %p82 = scmp.ne.s32.totalorder %s71, %s72
      %p83 = scmp.eq.s32.totalorder %s25, 0
      %p84 = por %p82, %p83
      %p85 = scmp.ne.s32.totalorder %s71, %s72
      %p86 = scmp.eq.s32.totalorder %s26, 1
      %p87 = por %p85, %p86
      %p89 = scmp.ne.s32.totalorder %s72, %s88
      %p90 = scmp.eq.s32.totalorder %s26, 0
      %p91 = por %p89, %p90
      %s92 = ssub.s32 %s28, %s35
      %p93 = scmp.eq.s32.totalorder %s92, 0
      %s95 = sadd.s32 %s94, 1
      %s96 = scalar_select %p93, %s94, %s95
      %p99 = pneg %p93
      %p100 = scmp.eq.s32.totalorder %s20, 1
      %p101 = por %p99, %p100
      %p102 = scmp.ne.s32.totalorder %s94, %s97
      %p103 = scmp.eq.s32.totalorder %s20, 0
      %p104 = por %p102, %p103
      %p105 = scmp.ne.s32.totalorder %s94, %s97
      %p106 = scmp.eq.s32.totalorder %s25, 1
      %p107 = por %p105, %p106
      %p108 = scmp.ne.s32.totalorder %s97, %s98
      %p109 = scmp.eq.s32.totalorder %s25, 0
      %p110 = por %p108, %p109
      %p111 = scmp.ne.s32.totalorder %s97, %s98
      %p112 = scmp.eq.s32.totalorder %s26, 1
      %p113 = por %p111, %p112
      %p115 = scmp.ne.s32.totalorder %s98, %s114
      %p116 = scmp.eq.s32.totalorder %s26, 0
      %p117 = por %p115, %p116
      %s118 = ssub.s32 %s28, %s35
      %p119 = scmp.eq.s32.totalorder %s118, 0
      %s121 = sadd.s32 %s120, 1
      %s122 = scalar_select %p119, %s120, %s121
      %p125 = pneg %p119
      %p126 = scmp.eq.s32.totalorder %s20, 1
      %p127 = por %p125, %p126
      %p128 = scmp.ne.s32.totalorder %s120, %s123
      %p129 = scmp.eq.s32.totalorder %s20, 0
      %p130 = por %p128, %p129
      %p131 = scmp.ne.s32.totalorder %s120, %s123
      %p132 = scmp.eq.s32.totalorder %s25, 1
      %p133 = por %p131, %p132
      %p134 = scmp.ne.s32.totalorder %s123, %s124
      %p135 = scmp.eq.s32.totalorder %s25, 0
      %p136 = por %p134, %p135
      %p137 = scmp.ne.s32.totalorder %s123, %s124
      %p138 = scmp.eq.s32.totalorder %s26, 1
      %p139 = por %p137, %p138
      %p141 = scmp.ne.s32.totalorder %s124, %s140
      %p142 = scmp.eq.s32.totalorder %s26, 0
      %p143 = por %p141, %p142
      %s145 = sadd.s32 %s144, 1
      %p148 = scmp.eq.s32.totalorder %s20, 1
      %p149 = scmp.ne.s32.totalorder %s144, %s146
      %p150 = scmp.eq.s32.totalorder %s20, 0
      %p151 = por %p149, %p150
      %p152 = scmp.ne.s32.totalorder %s144, %s146
      %p153 = scmp.eq.s32.totalorder %s25, 1
      %p154 = por %p152, %p153
      %p155 = scmp.ne.s32.totalorder %s146, %s147
      %p156 = scmp.eq.s32.totalorder %s25, 0
      %p157 = por %p155, %p156
      %p158 = scmp.ne.s32.totalorder %s146, %s147
      %p159 = scmp.eq.s32.totalorder %s26, 1
      %p160 = por %p158, %p159
      %p162 = scmp.ne.s32.totalorder %s147, %s161
      %p163 = scmp.eq.s32.totalorder %s26, 0
      %p164 = por %p162, %p163
      %s166 = sadd.s32 %s165, 1
      %p169 = scmp.eq.s32.totalorder %s20, 1
      %p170 = scmp.ne.s32.totalorder %s165, %s167
      %p171 = scmp.eq.s32.totalorder %s20, 0
      %p172 = por %p170, %p171
      %p173 = scmp.ne.s32.totalorder %s165, %s167
      %p174 = scmp.eq.s32.totalorder %s25, 1
      %p175 = por %p173, %p174
      %p176 = scmp.ne.s32.totalorder %s167, %s168
      %p177 = scmp.eq.s32.totalorder %s25, 0
      %p178 = por %p176, %p177
      %p179 = scmp.ne.s32.totalorder %s167, %s168
      %p180 = scmp.eq.s32.totalorder %s26, 1
      %p181 = por %p179, %p180
      %p183 = scmp.ne.s32.totalorder %s168, %s182
      %p184 = scmp.eq.s32.totalorder %s26, 0
      %p185 = por %p183, %p184
      %s187 = sadd.s32 %s186, 1
      %p190 = scmp.eq.s32.totalorder %s20, 1
      %p191 = scmp.ne.s32.totalorder %s186, %s188
      %p192 = scmp.eq.s32.totalorder %s20, 0
      %p193 = por %p191, %p192
      %p194 = scmp.ne.s32.totalorder %s186, %s188
      %p195 = scmp.eq.s32.totalorder %s25, 1
      %p196 = por %p194, %p195
      %p197 = scmp.ne.s32.totalorder %s188, %s189
      %p198 = scmp.eq.s32.totalorder %s25, 0
      %p199 = por %p197, %p198
      %p200 = scmp.ne.s32.totalorder %s188, %s189
      %p201 = scmp.eq.s32.totalorder %s26, 1
      %p202 = por %p200, %p201
      %p204 = scmp.ne.s32.totalorder %s189, %s203
      %p205 = scmp.eq.s32.totalorder %s26, 0
      %p206 = por %p204, %p205
      %s207 = ssub.s32 %s27, %s39
      %p208 = scmp.eq.s32.totalorder %s207, 0
      %s210 = sadd.s32 %s209, 1
      %s211 = scalar_select %p208, %s209, %s210
      %p214 = pneg %p208
      %p215 = scmp.eq.s32.totalorder %s20, 1
      %p216 = por %p214, %p215
      %p217 = scmp.ne.s32.totalorder %s209, %s212
      %p218 = scmp.eq.s32.totalorder %s20, 0
      %p219 = por %p217, %p218
      %p220 = scmp.ne.s32.totalorder %s209, %s212
      %p221 = scmp.eq.s32.totalorder %s25, 1
      %p222 = por %p220, %p221
      %p223 = scmp.ne.s32.totalorder %s212, %s213
      %p224 = scmp.eq.s32.totalorder %s25, 0
      %p225 = por %p223, %p224
      %p226 = scmp.ne.s32.totalorder %s212, %s213
      %p227 = scmp.eq.s32.totalorder %s26, 1
      %p228 = por %p226, %p227
      %p230 = scmp.ne.s32.totalorder %s213, %s229
      %p231 = scmp.eq.s32.totalorder %s26, 0
      %p232 = por %p230, %p231
      %p233 = scmp.le.s32.totalorder 1, %s20
      %p234 = scmp.lt.s32.totalorder %s20, 3
      %p235 = pnand %p233, %p234
      %p236 = pneg %p235
      // Predicated region
      $region9: #{tpu_custom_call.1} parent=5 // pred_check
        _
      $region10: #{tpu_custom_call.1} parent=5 // pred_check_branch
        %238 = sbr.rel (%p235) target = $region12
      $region11: #{tpu_custom_call.1} parent=5 // pred_region
        %s239 = ssub.s32 %s20, 1
        // Predicated region
        $region13: #{tpu_custom_call.1} parent=11 // pred_check
          %p240 = pneg %p84
        $region14: #{tpu_custom_call.1} parent=11 // pred_check_branch
          %242 = sbr.rel (%p240) target = $region16
        $region15: #{tpu_custom_call.1} parent=11 // pred_region
          %s244 = ssub.s32 2048, 2048
          %245 = vsyncadd [#allocation7], %s244
          %s246 = smul.addr %s30, 128
          %s247 = scalar_lea.hbm %s1, %s246
          %s248 = sshll.u32 [#allocation6], 4
          %s249 = int_to_ptr.vmem [resolvable:$true] %s248
          %254 = dma.hbm_to_vmem [thread:$0]  %s247, 2048, %s249, [#allocation7], 128, 128, 8
        $region16: #{tpu_custom_call.1} parent=11 // pred_fallthru
          _
        // Predicated region
        $region17: #{tpu_custom_call.1} parent=11 // pred_check
          %p255 = pneg %p110
        $region18: #{tpu_custom_call.1} parent=11 // pred_check_branch
          %257 = sbr.rel (%p255) target = $region20
        $region19: #{tpu_custom_call.1} parent=11 // pred_region
          %p258 = scmp.lt.s32.totalorder %s30, 0
          %s259 = scalar_select %p258, %s30, 0
          %s260 = scalar_lea.vmem %s2, %s259
        $region20: #{tpu_custom_call.1} parent=11 // pred_fallthru
          _
        // Predicated region
        $region21: #{tpu_custom_call.1} parent=11 // pred_check
          %p261 = pneg %p136
        $region22: #{tpu_custom_call.1} parent=11 // pred_check_branch
          %263 = sbr.rel (%p261) target = $region24
        $region23: #{tpu_custom_call.1} parent=11 // pred_region
          %s264 = smul.u32 16, %s30
          %s266 = ssub.s32 2048, 2048
          %267 = vsyncadd [#allocation7], %s266
          %s268 = smul.addr %s264, 128
          %s269 = scalar_lea.hbm %s3, %s268
          %s270 = sshll.u32 [#allocation8], 4
          %s271 = int_to_ptr.vmem [resolvable:$true] %s270
          %276 = dma.hbm_to_vmem [thread:$0]  %s269, 2048, %s271, [#allocation7], 128, 128, 8
        $region24: #{tpu_custom_call.1} parent=11 // pred_fallthru
          _
        // Predicated region
        $region25: #{tpu_custom_call.1} parent=11 // pred_check
          %p277 = pneg %p157
        $region26: #{tpu_custom_call.1} parent=11 // pred_check_branch
          %279 = sbr.rel (%p277) target = $region28
        $region27: #{tpu_custom_call.1} parent=11 // pred_region
          _
        $region28: #{tpu_custom_call.1} parent=11 // pred_fallthru
          _
        // Predicated region
        $region29: #{tpu_custom_call.1} parent=11 // pred_check
          %p280 = pneg %p178
        $region30: #{tpu_custom_call.1} parent=11 // pred_check_branch
          %282 = sbr.rel (%p280) target = $region32
        $region31: #{tpu_custom_call.1} parent=11 // pred_region
          _
        $region32: #{tpu_custom_call.1} parent=11 // pred_fallthru
          _
        // Predicated region
        $region33: #{tpu_custom_call.1} parent=11 // pred_check
          %p283 = pneg %p199
        $region34: #{tpu_custom_call.1} parent=11 // pred_check_branch
          %285 = sbr.rel (%p283) target = $region36
        $region35: #{tpu_custom_call.1} parent=11 // pred_region
          _
        $region36: #{tpu_custom_call.1} parent=11 // pred_fallthru
          _
      $region12: #{tpu_custom_call.1} parent=5 // pred_fallthru
        _
      %p286 = scmp.lt.s32.totalorder %s20, 2
      // Predicated region
      $region37: #{tpu_custom_call.1} parent=5 // pred_check
        %p287 = pneg %p286
      $region38: #{tpu_custom_call.1} parent=5 // pred_check_branch
        %289 = sbr.rel (%p287) target = $region40
      $region39: #{tpu_custom_call.1} parent=5 // pred_region
        // Predicated region
        $region41: #{tpu_custom_call.1} parent=39 // pred_check
          %p290 = pneg %p52
        $region42: #{tpu_custom_call.1} parent=39 // pred_check_branch
          %292 = sbr.rel (%p290) target = $region44
        $region43: #{tpu_custom_call.1} parent=39 // pred_region
          %s293 = sand.u32 %s42, 1
          %s294 = scalar_lea.sflag [#allocation4], %s293
          %s295 = sand.u32 %s42, 1
          %s296 = smul.addr %s295, 8
          %s297 = scalar_lea.vmem [#allocation3], %s296
          %s299 = ssub.s32 128, 128
          %300 = vsyncadd %s294, %s299
          %s301 = smul.addr %s27, 128
          %s302 = scalar_lea.hbm %s0, %s301
          %s304 = sshll.u32 %s297, 4
          %s305 = int_to_ptr.vmem [resolvable:$true] %s304
          %307 = dma.hbm_to_vmem [thread:$0]  %s302, 128, %s305, %s294
        $region44: #{tpu_custom_call.1} parent=39 // pred_fallthru
          _
      $region40: #{tpu_custom_call.1} parent=5 // pred_fallthru
        _
      %p308 = scmp.le.s32.totalorder 1, %s20
      %p309 = scmp.lt.s32.totalorder %s20, 3
      %p310 = pnand %p308, %p309
      %p311 = pneg %p310
      // Predicated region
      $region45: #{tpu_custom_call.1} parent=5 // pred_check
        _
      $region46: #{tpu_custom_call.1} parent=5 // pred_check_branch
        %313 = sbr.rel (%p310) target = $region48
      $region47: #{tpu_custom_call.1} parent=5 // pred_region
        %s314 = ssub.s32 %s20, 1
        %s315 = sand.u32 %s45, 1
        %s316 = scalar_lea.sflag [#allocation4], %s315
        %s317 = sand.u32 %s45, 1
        %s318 = smul.addr %s317, 8
        %s319 = scalar_lea.vmem [#allocation3], %s318
        // Predicated region
        $region49: #{tpu_custom_call.1} parent=47 // pred_check
          %p320 = pneg %p58
        $region50: #{tpu_custom_call.1} parent=47 // pred_check_branch
          %322 = sbr.rel (%p320) target = $region52
        $region51: #{tpu_custom_call.1} parent=47 // pred_region
          %323 = dma.done %s316, 128
        $region52: #{tpu_custom_call.1} parent=47 // pred_fallthru
          _
        // Predicated region
        $region53: #{tpu_custom_call.1} parent=47 // pred_check
          %p324 = pneg %p84
        $region54: #{tpu_custom_call.1} parent=47 // pred_check_branch
          %326 = sbr.rel (%p324) target = $region56
        $region55: #{tpu_custom_call.1} parent=47 // pred_region
          %327 = dma.done [#allocation7], 2048
        $region56: #{tpu_custom_call.1} parent=47 // pred_fallthru
          _
        // Predicated region
        $region57: #{tpu_custom_call.1} parent=47 // pred_check
          %p328 = pneg %p136
        $region58: #{tpu_custom_call.1} parent=47 // pred_check_branch
          %330 = sbr.rel (%p328) target = $region60
        $region59: #{tpu_custom_call.1} parent=47 // pred_region
          %331 = dma.done [#allocation7], 2048
        $region60: #{tpu_custom_call.1} parent=47 // pred_fallthru
          _
        %s332 = sand.u32 %s45, 1
        %s333 = scalar_lea.sflag [#allocation4], %s332
        %s334 = sand.u32 %s45, 1
        %s335 = smul.addr %s334, 8
        %s336 = scalar_lea.vmem [#allocation3], %s335
        %p337 = pneg %p58
        %p338 = pneg %p55
        %p339 = pneg %p84
        %p340 = pneg %p81
        %p341 = scmp.lt.s32.totalorder %s30, 0
        %s342 = scalar_select %p341, %s30, 0
        %s343 = scalar_lea.vmem %s2, %s342
        %p344 = pneg %p110
        %p345 = pneg %p107
        %p346 = pneg %p136
        %p347 = pneg %p133
        %p348 = pneg %p157
        %p349 = pneg %p154
        %p350 = pneg %p178
        %p351 = pneg %p175
        %p352 = pneg %p199
        %p353 = pneg %p196
        %p354 = pneg %p225
        %p355 = pneg %p222
        %s356 = sand.u32 %s212, 1
        %s357 = scalar_lea.sflag [#allocation5], %s356
        %s358 = sand.u32 %s212, 1
        %s359 = smul.addr %s358, 8
        %s360 = scalar_lea.vmem [#allocation9], %s359
        %p361 = scmp.lt.s32.totalorder %s30, 0
        %s362 = scalar_select %p361, %s30, 0
        %s363 = scalar_lea.vmem %s2, %s362
        %s364 = smul.u32 16, %s30
        %p365 = scmp.eq.s32.totalorder %s30, 0
        // Predicated region
        $region61: #{tpu_custom_call.1} parent=47 // pred_check
          %p366 = pneg %p365
        $region62: #{tpu_custom_call.1} parent=47 // pred_check_branch
          %368 = sbr.rel (%p366) target = $region64
        $region63: #{tpu_custom_call.1} parent=47 // pred_region
          %369 = vst [vmem:[#allocation2] sm:$0xff] 0.0
        $region64: #{tpu_custom_call.1} parent=47 // pred_fallthru
          _
        %v370 = vld [vmem:[%s319] sm:$0xff]
        %v371 = vld [vmem:[#allocation6] sm:$0xff]
        %v372 = vld [vmem:[#allocation6 + $0x8] sm:$0xff]
        %v373 = vld [vmem:[#allocation6 + $0x10] sm:$0xff]
        %v374 = vld [vmem:[#allocation6 + $0x18] sm:$0xff]
        %v375 = vld [vmem:[#allocation6 + $0x20] sm:$0xff]
        %v376 = vld [vmem:[#allocation6 + $0x28] sm:$0xff]
        %v377 = vld [vmem:[#allocation6 + $0x30] sm:$0xff]
        %v378 = vld [vmem:[#allocation6 + $0x38] sm:$0xff]
        %v379 = vld [vmem:[#allocation6 + $0x40] sm:$0xff]
        %v380 = vld [vmem:[#allocation6 + $0x48] sm:$0xff]
        %v381 = vld [vmem:[#allocation6 + $0x50] sm:$0xff]
        %v382 = vld [vmem:[#allocation6 + $0x58] sm:$0xff]
        %v383 = vld [vmem:[#allocation6 + $0x60] sm:$0xff]
        %v384 = vld [vmem:[#allocation6 + $0x68] sm:$0xff]
        %v385 = vld [vmem:[#allocation6 + $0x70] sm:$0xff]
        %v386 = vld [vmem:[#allocation6 + $0x78] sm:$0xff]
        %v387 = vld [vmem:[%s363] sm:$0x1]
        %v389 = vlaneseq
        %v390 = vshrl.u32 %v389, 7
        %v391 = vsub.s32 0, %v390
        %v392 = vrot.slane %v387, %v391
        %394 = vmatprep.subr.mxu0 0.0
        %395 = vmatpush1.msra.mxu0 %v371
        %396 = vmatprep.subr.mxu0 0.0
        %397 = vmatpush1.msra.mxu0 %v372
        %398 = vmatprep.subr.mxu0 0.0
        %399 = vmatpush1.msra.mxu0 %v373
        %400 = vmatprep.subr.mxu0 0.0
        %401 = vmatpush1.msra.mxu0 %v374
        %402 = vmatprep.subr.mxu0 0.0
        %403 = vmatpush1.msra.mxu0 %v375
        %404 = vmatprep.subr.mxu0 0.0
        %405 = vmatpush1.msra.mxu0 %v376
        %406 = vmatprep.subr.mxu0 0.0
        %407 = vmatpush1.msra.mxu0 %v377
        %408 = vmatprep.subr.mxu0 0.0
        %409 = vmatpush1.msra.mxu0 %v378
        %410 = vmatprep.subr.mxu0 0.0
        %411 = vmatpush1.msra.mxu0 %v379
        %412 = vmatprep.subr.mxu0 0.0
        %413 = vmatpush1.msra.mxu0 %v380
        %414 = vmatprep.subr.mxu0 0.0
        %415 = vmatpush1.msra.mxu0 %v381
        %416 = vmatprep.subr.mxu0 0.0
        %417 = vmatpush1.msra.mxu0 %v382
        %418 = vmatprep.subr.mxu0 0.0
        %419 = vmatpush1.msra.mxu0 %v383
        %420 = vmatprep.subr.mxu0 0.0
        %421 = vmatpush1.msra.mxu0 %v384
        %422 = vmatprep.subr.mxu0 0.0
        %423 = vmatpush1.msra.mxu0 %v385
        %424 = vmatprep.subr.mxu0 0.0
        %425 = vmatpush1.msra.mxu0 %v386
        %426 = vmatprep.subr.mxu0 0.0
        %427 = vmatpush1.msra.mxu0 0.0
        %428 = vmatprep.subr.mxu0 0.0
        %429 = vmatpush1.msra.mxu0 0.0
        %430 = vmatprep.subr.mxu0 0.0
        %431 = vmatpush1.msra.mxu0 0.0
        %432 = vmatprep.subr.mxu0 0.0
        %433 = vmatpush1.msra.mxu0 0.0
        %434 = vmatprep.subr.mxu0 0.0
        %435 = vmatpush1.msra.mxu0 0.0
        %436 = vmatprep.subr.mxu0 0.0
        %437 = vmatpush1.msra.mxu0 0.0
        %438 = vmatprep.subr.mxu0 0.0
        %439 = vmatpush1.msra.mxu0 0.0
        %440 = vmatprep.subr.mxu0 0.0
        %441 = vmatpush1.msra.mxu0 0.0
        %442 = vmatprep.subr.mxu0 0.0
        %443 = vmatpush1.msra.mxu0 0.0
        %444 = vmatprep.subr.mxu0 0.0
        %445 = vmatpush1.msra.mxu0 0.0
        %446 = vmatprep.subr.mxu0 0.0
        %447 = vmatpush1.msra.mxu0 0.0
        %448 = vmatprep.subr.mxu0 0.0
        %449 = vmatpush1.msra.mxu0 0.0
        %450 = vmatprep.subr.mxu0 0.0
        %451 = vmatpush1.msra.mxu0 0.0
        %452 = vmatprep.subr.mxu0 0.0
        %453 = vmatpush1.msra.mxu0 0.0
        %454 = vmatprep.subr.mxu0 0.0
        %455 = vmatpush1.msra.mxu0 0.0
        %456 = vmatprep.subr.mxu0 0.0
        %457 = vmatpush1.msra.mxu0 0.0
        %458 = vmatprep.mubr.f32.mxu0 0.0
        %459 = vmatmul.mubr.f32.gmra.mrb[0].mxu0 %v370
        %v460 = vpop.f32.mrb[0].mxu0
        %v461 = vadd.f32 %v392, %v460
        %v462 = vpop.f32.mrb[0].mxu0
        %463 = vdwg.mxu0
        %v464 = vmax.f32 %v461, 0.0
        %v465 = vld [vmem:[#allocation2] sm:$0xff]
        %v466 = vld [vmem:[#allocation8] sm:$0xff]
        %v467 = vld [vmem:[#allocation8 + $0x8] sm:$0xff]
        %v468 = vld [vmem:[#allocation8 + $0x10] sm:$0xff]
        %v469 = vld [vmem:[#allocation8 + $0x18] sm:$0xff]
        %v470 = vld [vmem:[#allocation8 + $0x20] sm:$0xff]
        %v471 = vld [vmem:[#allocation8 + $0x28] sm:$0xff]
        %v472 = vld [vmem:[#allocation8 + $0x30] sm:$0xff]
        %v473 = vld [vmem:[#allocation8 + $0x38] sm:$0xff]
        %v474 = vld [vmem:[#allocation8 + $0x40] sm:$0xff]
        %v475 = vld [vmem:[#allocation8 + $0x48] sm:$0xff]
        %v476 = vld [vmem:[#allocation8 + $0x50] sm:$0xff]
        %v477 = vld [vmem:[#allocation8 + $0x58] sm:$0xff]
        %v478 = vld [vmem:[#allocation8 + $0x60] sm:$0xff]
        %v479 = vld [vmem:[#allocation8 + $0x68] sm:$0xff]
        %v480 = vld [vmem:[#allocation8 + $0x70] sm:$0xff]
        %v481 = vld [vmem:[#allocation8 + $0x78] sm:$0xff]
        %482 = vmatprep.subr.mxu0 0.0
        %483 = vmatpush1.msra.mxu0 %v466
        %484 = vmatprep.subr.mxu0 0.0
        %485 = vmatpush1.msra.mxu0 %v467
        %486 = vmatprep.subr.mxu0 0.0
        %487 = vmatpush1.msra.mxu0 %v468
        %488 = vmatprep.subr.mxu0 0.0
        %489 = vmatpush1.msra.mxu0 %v469
        %490 = vmatprep.subr.mxu0 0.0
        %491 = vmatpush1.msra.mxu0 %v470
        %492 = vmatprep.subr.mxu0 0.0
        %493 = vmatpush1.msra.mxu0 %v471
        %494 = vmatprep.subr.mxu0 0.0
        %495 = vmatpush1.msra.mxu0 %v472
        %496 = vmatprep.subr.mxu0 0.0
        %497 = vmatpush1.msra.mxu0 %v473
        %498 = vmatprep.subr.mxu0 0.0
        %499 = vmatpush1.msra.mxu0 %v474
        %500 = vmatprep.subr.mxu0 0.0
        %501 = vmatpush1.msra.mxu0 %v475
        %502 = vmatprep.subr.mxu0 0.0
        %503 = vmatpush1.msra.mxu0 %v476
        %504 = vmatprep.subr.mxu0 0.0
        %505 = vmatpush1.msra.mxu0 %v477
        %506 = vmatprep.subr.mxu0 0.0
        %507 = vmatpush1.msra.mxu0 %v478
        %508 = vmatprep.subr.mxu0 0.0
        %509 = vmatpush1.msra.mxu0 %v479
        %510 = vmatprep.subr.mxu0 0.0
        %511 = vmatpush1.msra.mxu0 %v480
        %512 = vmatprep.subr.mxu0 0.0
        %513 = vmatpush1.msra.mxu0 %v481
        %514 = vmatprep.subr.mxu0 0.0
        %515 = vmatpush1.msra.mxu0 0.0
        %516 = vmatprep.subr.mxu0 0.0
        %517 = vmatpush1.msra.mxu0 0.0
        %518 = vmatprep.subr.mxu0 0.0
        %519 = vmatpush1.msra.mxu0 0.0
        %520 = vmatprep.subr.mxu0 0.0
        %521 = vmatpush1.msra.mxu0 0.0
        %522 = vmatprep.subr.mxu0 0.0
        %523 = vmatpush1.msra.mxu0 0.0
        %524 = vmatprep.subr.mxu0 0.0
        %525 = vmatpush1.msra.mxu0 0.0
        %526 = vmatprep.subr.mxu0 0.0
        %527 = vmatpush1.msra.mxu0 0.0
        %528 = vmatprep.subr.mxu0 0.0
        %529 = vmatpush1.msra.mxu0 0.0
        %530 = vmatprep.subr.mxu0 0.0
        %531 = vmatpush1.msra.mxu0 0.0
        %532 = vmatprep.subr.mxu0 0.0
        %533 = vmatpush1.msra.mxu0 0.0
        %534 = vmatprep.subr.mxu0 0.0
        %535 = vmatpush1.msra.mxu0 0.0
        %536 = vmatprep.subr.mxu0 0.0
        %537 = vmatpush1.msra.mxu0 0.0
        %538 = vmatprep.subr.mxu0 0.0
        %539 = vmatpush1.msra.mxu0 0.0
        %540 = vmatprep.subr.mxu0 0.0
        %541 = vmatpush1.msra.mxu0 0.0
        %542 = vmatprep.subr.mxu0 0.0
        %543 = vmatpush1.msra.mxu0 0.0
        %544 = vmatprep.subr.mxu0 0.0
        %545 = vmatpush1.msra.mxu0 0.0
        %546 = vmatprep.mubr.f32.mxu0 0.0
        %547 = vmatmul.mubr.f32.gmra.mrb[0].mxu0 %v464
        %v548 = vpop.f32.mrb[0].mxu0
        %v549 = vadd.f32 0.0, %v548
        %v550 = vpop.f32.mrb[0].mxu0
        %551 = vdwg.mxu0
        %v552 = vadd.f32 %v465, %v549
        %553 = vst [vmem:[#allocation2] sm:$0xff] %v552
        // Predicated region
        $region65: #{tpu_custom_call.1} parent=47 // pred_check
          %p554 = pneg %p365
        $region66: #{tpu_custom_call.1} parent=47 // pred_check_branch
          %556 = sbr.rel (%p554) target = $region68
        $region67: #{tpu_custom_call.1} parent=47 // pred_region
          %v557 = vld [vmem:[#allocation2] sm:$0xff]
          %v558 = vadd.f32 %v370, %v557
          %v559 = vld [vmem:[%s4] sm:$0x1]
          %v561 = vlaneseq
          %v562 = vshrl.u32 %v561, 7
          %v563 = vsub.s32 0, %v562
          %v564 = vrot.slane %v559, %v563
          %v566 = vadd.f32 %v558, %v564
          %567 = vadd.xlane.f32.xlu0 %v566
          %v568 = vpop.xlane.xlu0 %567
          %v569 = vmul.f32 %v568, 0.03125
          %v570 = vsub.f32 %v566, %v569
          %v571 = vlaneseq
          %v572 = vand.u32 %v571, 127
          %vm573 = vcmp.lt.s32.totalorder %v572, 32
          %v574 = vsel %vm573, 1, 0
          %vm575 = vcmp.eq.s32.totalorder %v574, 1
          %v576 = vsel %vm575, %v570, 0.0
          %v577 = vmul.f32 %v576, %v576
          %578 = vadd.xlane.f32.xlu0 %v577
          %v579 = vpop.xlane.xlu0 %578
          %v580 = vmul.f32 %v579, 0.03125
          %v581 = vadd.f32 %v580, 1e-05
          %v582 = vrsqrt.pop %v581
          %v583 = vmul.f32 %v576, %v582
          %v584 = vld [vmem:[%s5] sm:$0x1]
          %v586 = vlaneseq
          %v587 = vshrl.u32 %v586, 7
          %v588 = vsub.s32 0, %v587
          %v589 = vrot.slane %v584, %v588
          %v591 = vmul.f32 %v583, %v589
          %v592 = vld [vmem:[%s6] sm:$0x1]
          %v594 = vlaneseq
          %v595 = vshrl.u32 %v594, 7
          %v596 = vsub.s32 0, %v595
          %v597 = vrot.slane %v592, %v596
          %v599 = vadd.f32 %v591, %v597
          %600 = vst [vmem:[%s360] sm:$0xff] %v599
        $region68: #{tpu_custom_call.1} parent=47 // pred_fallthru
          _
        %s601 = sand.u32 %s212, 1
        %s602 = scalar_lea.sflag [#allocation5], %s601
        %s603 = sand.u32 %s212, 1
        %s604 = smul.addr %s603, 8
        %s605 = scalar_lea.vmem [#allocation9], %s604
        // Predicated region
        $region69: #{tpu_custom_call.1} parent=47 // pred_check
          %p606 = pneg %p222
        $region70: #{tpu_custom_call.1} parent=47 // pred_check_branch
          %608 = sbr.rel (%p606) target = $region72
        $region71: #{tpu_custom_call.1} parent=47 // pred_region
          %s610 = ssub.s32 128, 128
          %611 = vsyncadd %s602, %s610
          %s612 = smul.addr %s29, 128
          %s613 = scalar_lea.hbm %s7, %s612
          %s615 = sshll.u32 %s605, 4
          %s616 = int_to_ptr.vmem [resolvable:$true] %s615
          %618 = dma.vmem_to_hbm [thread:$0]  %s616, 128, %s613, %s602
        $region72: #{tpu_custom_call.1} parent=47 // pred_fallthru
          _
      $region48: #{tpu_custom_call.1} parent=5 // pred_fallthru
        _
      %p619 = scmp.le.s32.totalorder 2, %s20
      // Predicated region
      $region73: #{tpu_custom_call.1} parent=5 // pred_check
        %p620 = pneg %p619
      $region74: #{tpu_custom_call.1} parent=5 // pred_check_branch
        %622 = sbr.rel (%p620) target = $region76
      $region75: #{tpu_custom_call.1} parent=5 // pred_region
        %s623 = ssub.s32 %s20, 2
        // Predicated region
        $region77: #{tpu_custom_call.1} parent=75 // pred_check
          %p624 = pneg %p228
        $region78: #{tpu_custom_call.1} parent=75 // pred_check_branch
          %626 = sbr.rel (%p624) target = $region80
        $region79: #{tpu_custom_call.1} parent=75 // pred_region
          %s627 = sand.u32 %s213, 1
          %s628 = scalar_lea.sflag [#allocation5], %s627
          %s629 = sand.u32 %s213, 1
          %s630 = smul.addr %s629, 8
          %s631 = scalar_lea.vmem [#allocation9], %s630
          %632 = dma.done %s628, 128
        $region80: #{tpu_custom_call.1} parent=75 // pred_fallthru
          _
      $region76: #{tpu_custom_call.1} parent=5 // pred_fallthru
        _
    $region6: #{tpu_custom_call.1} parent=1 // loop_footer
      %s24 = sadd.s32 1, %s20
    $region7: #{tpu_custom_call.1} parent=1 // loop_footer_branch
      %19 = sbr.rel target = $region3
    $region8: #{tpu_custom_call.1} parent=1 // loop_exit
      _
    %633 = vsyncpa [#allocation4], 1
    %s634 = scalar_lea.sflag [#allocation4], 1
    %635 = vsyncpa %s634, 1
    %636 = vsyncpa [#allocation7], 1
    %637 = vsyncpa [#allocation5], 1
    %s638 = scalar_lea.sflag [#allocation5], 1
    %639 = vsyncpa %s638, 1

// kernel: tpu_custom_call.1
$region0: #{tpu_custom_call.1}
  #allocation0 [shape = 'u32[]', space=smem, size = 0x4, offset = 0x4, fixed_abs, tag = 'smem constant byte address 0x4 - core index']
  #allocation1 [shape = 'u32[144,128]{1,0:T(1,128)}', space=vmem, size = 0x12000, scoped, tag = 'internal scratch']
  #allocation2 [shape = 'f32[8,128]{1,0:T(8,128)}', space=vmem, size = 0x1000, scoped, tag = 'scratch operand']
  %s0 = inlined_call_operand.hbm [shape: f32[16,128], index: 0, kind: input, shape index: {}]
  %s1 = inlined_call_operand.hbm [shape: f32[128,128], index: 1, kind: input, shape index: {}]
  %s2 = inlined_call_operand.vmem [shape: f32[1,128], index: 2, kind: input, shape index: {}]
  %s3 = inlined_call_operand.hbm [shape: f32[128,128], index: 3, kind: input, shape index: {}]
  %s4 = inlined_call_operand.vmem [shape: f32[1,128], index: 4, kind: input, shape index: {}]
  %s5 = inlined_call_operand.vmem [shape: f32[1,128], index: 5, kind: input, shape index: {}]
  %s6 = inlined_call_operand.vmem [shape: f32[1,128], index: 6, kind: input, shape index: {}]
  %s7 = inlined_call_operand.hbm [shape: f32[16,128], index: 7, kind: output, shape index: {}]
  %s8 = sld [smem:[#allocation0]]
  $region81: #{tpu_custom_call.1} parent=0
    _
  %s10 = ssub.s32 1, %s8
  %s11 = scalar_select 0, %s10, %s8
  $region1: #{tpu_custom_call.1} parent=0
    #allocation3 [shape = 'u8[8192]{0}', space=vmem, size = 0x2000, scoped, tag = 'input window, operand 0']
    #allocation4 [shape = 's32[2]{0}', space=sflag, size = 0x8, scoped, tag = 'scoped memory for tpu_custom_call.1']
    #allocation5 [shape = 's32[2]{0}', space=sflag, size = 0x8, scoped, tag = 'scoped memory for tpu_custom_call.1']
    #allocation6 [shape = 'u8[65536]{0}', space=vmem, size = 0x10000, scoped, tag = 'input window, operand 1, single buffered']
    #allocation7 [shape = 's32[1]{0}', space=sflag, size = 0x4, scoped, tag = 'scoped memory for tpu_custom_call.1']
    #allocation8 [shape = 'u8[65536]{0}', space=vmem, size = 0x10000, scoped, tag = 'input window, operand 3, single buffered']
    #allocation9 [shape = 'u8[8192]{0}', space=vmem, size = 0x2000, scoped, tag = 'output window, operand 0']
    %12 = vsyncpa [#allocation4], 0
    %s13 = scalar_lea.sflag [#allocation4], 1
    %14 = vsyncpa %s13, 0
    %15 = vsyncpa [#allocation7], 0
    %16 = vsyncpa [#allocation5], 0
    %s17 = scalar_lea.sflag [#allocation5], 1
    %18 = vsyncpa %s17, 0
    loop: start=0, step=1, limit=4
    $region2: #{tpu_custom_call.1} parent=1 // loop_pre_header
      _
    $region3: #{tpu_custom_call.1} parent=1 // loop_header
      %s20 = sphi 0, %s24
      %p21 = scmp.ge.s32.totalorder %s20, 4
      %s27 = sphi 0, %s39
      %s28 = sphi 0, %s35
      %s29 = sphi 0, %s27
      %s30 = sphi 0, %s28
      %s31 = sphi 0, %s29
      %s32 = sphi 0, %s30
      %s42 = sphi 0, %s44
      %s45 = sphi 0, %s42
      %s46 = sphi 0, %s45
      %s62 = sphi 0, %s46
      %s68 = sphi 0, %s70
      %s71 = sphi 0, %s68
      %s72 = sphi 0, %s71
      %s88 = sphi 0, %s72
      %s94 = sphi 0, %s96
      %s97 = sphi 0, %s94
      %s98 = sphi 0, %s97
      %s114 = sphi 0, %s98
      %s120 = sphi 0, %s122
      %s123 = sphi 0, %s120
      %s124 = sphi 0, %s123
      %s140 = sphi 0, %s124
      %s144 = sphi 0, %s144
      %s146 = sphi 0, %s144
      %s147 = sphi 0, %s146
      %s161 = sphi 0, %s147
      %s165 = sphi 0, %s165
      %s167 = sphi 0, %s165
      %s168 = sphi 0, %s167
      %s182 = sphi 0, %s168
      %s186 = sphi 0, %s186
      %s188 = sphi 0, %s186
      %s189 = sphi 0, %s188
      %s203 = sphi 0, %s189
      %s209 = sphi 0, %s211
      %s212 = sphi 0, %s209
      %s213 = sphi 0, %s212
      %s229 = sphi 0, %s213
    $region4: #{tpu_custom_call.1} parent=1 // loop_header_branch
      %23 = sbr.rel (%p21) target = $region8
    $region5: #{tpu_custom_call.1} parent=1 // loop_body
      %s25 = ssub.s32 %s20, 1
      %s26 = ssub.s32 %s20, 2
      %s33 = sadd.s32 1, %s28
      %p34 = scmp.ge.s32.totalorder %s33, 1
      %s35 = scalar_select %p34, 0, %s33
      %s36 = sadd.s32 1, %s27
      %s37 = scalar_select %p34, %s36, %s27
      %p38 = scmp.ge.s32.totalorder %s37, 2
      %s39 = scalar_select %p38, 0, %s37
      %s40 = ssub.s32 %s27, %s39
      %p41 = scmp.eq.s32.totalorder %s40, 0
      %s43 = sadd.s32 %s42, 1
      %s44 = scalar_select %p41, %s42, %s43
      %p47 = pneg %p41
      %p48 = scmp.eq.s32.totalorder %s20, 1
      %p49 = por %p47, %p48
      %p50 = scmp.ne.s32.totalorder %s42, %s45
      %p51 = scmp.eq.s32.totalorder %s20, 0
      %p52 = por %p50, %p51
      %p53 = scmp.ne.s32.totalorder %s42, %s45
      %p54 = scmp.eq.s32.totalorder %s25, 1
      %p55 = por %p53, %p54
      %p56 = scmp.ne.s32.totalorder %s45, %s46
      %p57 = scmp.eq.s32.totalorder %s25, 0
      %p58 = por %p56, %p57
      %p59 = scmp.ne.s32.totalorder %s45, %s46
      %p60 = scmp.eq.s32.totalorder %s26, 1
      %p61 = por %p59, %p60
      %p63 = scmp.ne.s32.totalorder %s46, %s62
      %p64 = scmp.eq.s32.totalorder %s26, 0
      %p65 = por %p63, %p64
      %s66 = ssub.s32 %s28, %s35
      %p67 = scmp.eq.s32.totalorder %s66, 0
      %s69 = sadd.s32 %s68, 1
      %s70 = scalar_select %p67, %s68, %s69
      %p73 = pneg %p67
      %p74 = scmp.eq.s32.totalorder %s20, 1
      %p75 = por %p73, %p74
      %p76 = scmp.ne.s32.totalorder %s68, %s71
      %p77 = scmp.eq.s32.totalorder %s20, 0
      %p78 = por %p76, %p77
      %p79 = scmp.ne.s32.totalorder %s68, %s71
      %p80 = scmp.eq.s32.totalorder %s25, 1
      %p81 = por %p79, %p80
      %p82 = scmp.ne.s32.totalorder %s71, %s72
      %p83 = scmp.eq.s32.totalorder %s25, 0
      %p84 = por %p82, %p83
      %p85 = scmp.ne.s32.totalorder %s71, %s72
      %p86 = scmp.eq.s32.totalorder %s26, 1
      %p87 = por %p85, %p86
      %p89 = scmp.ne.s32.totalorder %s72, %s88
      %p90 = scmp.eq.s32.totalorder %s26, 0
      %p91 = por %p89, %p90
      %s92 = ssub.s32 %s28, %s35
      %p93 = scmp.eq.s32.totalorder %s92, 0
      %s95 = sadd.s32 %s94, 1
      %s96 = scalar_select %p93, %s94, %s95
      %p99 = pneg %p93
      %p100 = scmp.eq.s32.totalorder %s20, 1
      %p101 = por %p99, %p100
      %p102 = scmp.ne.s32.totalorder %s94, %s97
      %p103 = scmp.eq.s32.totalorder %s20, 0
      %p104 = por %p102, %p103
      %p105 = scmp.ne.s32.totalorder %s94, %s97
      %p106 = scmp.eq.s32.totalorder %s25, 1
      %p107 = por %p105, %p106
      %p108 = scmp.ne.s32.totalorder %s97, %s98
      %p109 = scmp.eq.s32.totalorder %s25, 0
      %p110 = por %p108, %p109
      %p111 = scmp.ne.s32.totalorder %s97, %s98
      %p112 = scmp.eq.s32.totalorder %s26, 1
      %p113 = por %p111, %p112
      %p115 = scmp.ne.s32.totalorder %s98, %s114
      %p116 = scmp.eq.s32.totalorder %s26, 0
      %p117 = por %p115, %p116
      %s118 = ssub.s32 %s28, %s35
      %p119 = scmp.eq.s32.totalorder %s118, 0
      %s121 = sadd.s32 %s120, 1
      %s122 = scalar_select %p119, %s120, %s121
      %p125 = pneg %p119
      %p126 = scmp.eq.s32.totalorder %s20, 1
      %p127 = por %p125, %p126
      %p128 = scmp.ne.s32.totalorder %s120, %s123
      %p129 = scmp.eq.s32.totalorder %s20, 0
      %p130 = por %p128, %p129
      %p131 = scmp.ne.s32.totalorder %s120, %s123
      %p132 = scmp.eq.s32.totalorder %s25, 1
      %p133 = por %p131, %p132
      %p134 = scmp.ne.s32.totalorder %s123, %s124
      %p135 = scmp.eq.s32.totalorder %s25, 0
      %p136 = por %p134, %p135
      %p137 = scmp.ne.s32.totalorder %s123, %s124
      %p138 = scmp.eq.s32.totalorder %s26, 1
      %p139 = por %p137, %p138
      %p141 = scmp.ne.s32.totalorder %s124, %s140
      %p142 = scmp.eq.s32.totalorder %s26, 0
      %p143 = por %p141, %p142
      %s145 = sadd.s32 %s144, 1
      %p148 = scmp.eq.s32.totalorder %s20, 1
      %p149 = scmp.ne.s32.totalorder %s144, %s146
      %p150 = scmp.eq.s32.totalorder %s20, 0
      %p151 = por %p149, %p150
      %p152 = scmp.ne.s32.totalorder %s144, %s146
      %p153 = scmp.eq.s32.totalorder %s25, 1
      %p154 = por %p152, %p153
      %p155 = scmp.ne.s32.totalorder %s146, %s147
      %p156 = scmp.eq.s32.totalorder %s25, 0
      %p157 = por %p155, %p156
      %p158 = scmp.ne.s32.totalorder %s146, %s147
      %p159 = scmp.eq.s32.totalorder %s26, 1
      %p160 = por %p158, %p159
      %p162 = scmp.ne.s32.totalorder %s147, %s161
      %p163 = scmp.eq.s32.totalorder %s26, 0
      %p164 = por %p162, %p163
      %s166 = sadd.s32 %s165, 1
      %p169 = scmp.eq.s32.totalorder %s20, 1
      %p170 = scmp.ne.s32.totalorder %s165, %s167
      %p171 = scmp.eq.s32.totalorder %s20, 0
      %p172 = por %p170, %p171
      %p173 = scmp.ne.s32.totalorder %s165, %s167
      %p174 = scmp.eq.s32.totalorder %s25, 1
      %p175 = por %p173, %p174
      %p176 = scmp.ne.s32.totalorder %s167, %s168
      %p177 = scmp.eq.s32.totalorder %s25, 0
      %p178 = por %p176, %p177
      %p179 = scmp.ne.s32.totalorder %s167, %s168
      %p180 = scmp.eq.s32.totalorder %s26, 1
      %p181 = por %p179, %p180
      %p183 = scmp.ne.s32.totalorder %s168, %s182
      %p184 = scmp.eq.s32.totalorder %s26, 0
      %p185 = por %p183, %p184
      %s187 = sadd.s32 %s186, 1
      %p190 = scmp.eq.s32.totalorder %s20, 1
      %p191 = scmp.ne.s32.totalorder %s186, %s188
      %p192 = scmp.eq.s32.totalorder %s20, 0
      %p193 = por %p191, %p192
      %p194 = scmp.ne.s32.totalorder %s186, %s188
      %p195 = scmp.eq.s32.totalorder %s25, 1
      %p196 = por %p194, %p195
      %p197 = scmp.ne.s32.totalorder %s188, %s189
      %p198 = scmp.eq.s32.totalorder %s25, 0
      %p199 = por %p197, %p198
      %p200 = scmp.ne.s32.totalorder %s188, %s189
      %p201 = scmp.eq.s32.totalorder %s26, 1
      %p202 = por %p200, %p201
      %p204 = scmp.ne.s32.totalorder %s189, %s203
      %p205 = scmp.eq.s32.totalorder %s26, 0
      %p206 = por %p204, %p205
      %s207 = ssub.s32 %s27, %s39
      %p208 = scmp.eq.s32.totalorder %s207, 0
      %s210 = sadd.s32 %s209, 1
      %s211 = scalar_select %p208, %s209, %s210
      %p214 = pneg %p208
      %p215 = scmp.eq.s32.totalorder %s20, 1
      %p216 = por %p214, %p215
      %p217 = scmp.ne.s32.totalorder %s209, %s212
      %p218 = scmp.eq.s32.totalorder %s20, 0
      %p219 = por %p217, %p218
      %p220 = scmp.ne.s32.totalorder %s209, %s212
      %p221 = scmp.eq.s32.totalorder %s25, 1
      %p222 = por %p220, %p221
      %p223 = scmp.ne.s32.totalorder %s212, %s213
      %p224 = scmp.eq.s32.totalorder %s25, 0
      %p225 = por %p223, %p224
      %p226 = scmp.ne.s32.totalorder %s212, %s213
      %p227 = scmp.eq.s32.totalorder %s26, 1
      %p228 = por %p226, %p227
      %p230 = scmp.ne.s32.totalorder %s213, %s229
      %p231 = scmp.eq.s32.totalorder %s26, 0
      %p232 = por %p230, %p231
      %p233 = scmp.le.s32.totalorder 1, %s20
      %p234 = scmp.lt.s32.totalorder %s20, 3
      %p235 = pnand %p233, %p234
      %p236 = pneg %p235
      // Predicated region
      $region9: #{tpu_custom_call.1} parent=5 // pred_check
        _
      $region10: #{tpu_custom_call.1} parent=5 // pred_check_branch
        %238 = sbr.rel (%p235) target = $region12
      $region11: #{tpu_custom_call.1} parent=5 // pred_region
        %s239 = ssub.s32 %s20, 1
        // Predicated region
        $region13: #{tpu_custom_call.1} parent=11 // pred_check
          %p240 = pneg %p84
        $region14: #{tpu_custom_call.1} parent=11 // pred_check_branch
          %242 = sbr.rel (%p240) target = $region16
        $region15: #{tpu_custom_call.1} parent=11 // pred_region
          %s244 = ssub.s32 2048, 2048
          %245 = vsyncadd [#allocation7], %s244
          %s246 = smul.addr %s30, 128
          %s247 = scalar_lea.hbm %s1, %s246
          %s248 = sshll.u32 [#allocation6], 4
          %s249 = int_to_ptr.vmem [resolvable:$true] %s248
          %254 = dma.hbm_to_vmem [thread:$0]  %s247, 2048, %s249, [#allocation7], 128, 128, 8
        $region16: #{tpu_custom_call.1} parent=11 // pred_fallthru
          _
        // Predicated region
        $region17: #{tpu_custom_call.1} parent=11 // pred_check
          %p255 = pneg %p110
        $region18: #{tpu_custom_call.1} parent=11 // pred_check_branch
          %257 = sbr.rel (%p255) target = $region20
        $region19: #{tpu_custom_call.1} parent=11 // pred_region
          %p258 = scmp.lt.s32.totalorder %s30, 0
          %s259 = scalar_select %p258, %s30, 0
          %s260 = scalar_lea.vmem %s2, %s259
        $region20: #{tpu_custom_call.1} parent=11 // pred_fallthru
          _
        // Predicated region
        $region21: #{tpu_custom_call.1} parent=11 // pred_check
          %p261 = pneg %p136
        $region22: #{tpu_custom_call.1} parent=11 // pred_check_branch
          %263 = sbr.rel (%p261) target = $region24
        $region23: #{tpu_custom_call.1} parent=11 // pred_region
          %s264 = smul.u32 16, %s30
          %s266 = ssub.s32 2048, 2048
          %267 = vsyncadd [#allocation7], %s266
          %s268 = smul.addr %s264, 128
          %s269 = scalar_lea.hbm %s3, %s268
          %s270 = sshll.u32 [#allocation8], 4
          %s271 = int_to_ptr.vmem [resolvable:$true] %s270
          %276 = dma.hbm_to_vmem [thread:$0]  %s269, 2048, %s271, [#allocation7], 128, 128, 8
        $region24: #{tpu_custom_call.1} parent=11 // pred_fallthru
          _
        // Predicated region
        $region25: #{tpu_custom_call.1} parent=11 // pred_check
          %p277 = pneg %p157
        $region26: #{tpu_custom_call.1} parent=11 // pred_check_branch
          %279 = sbr.rel (%p277) target = $region28
        $region27: #{tpu_custom_call.1} parent=11 // pred_region
          _
        $region28: #{tpu_custom_call.1} parent=11 // pred_fallthru
          _
        // Predicated region
        $region29: #{tpu_custom_call.1} parent=11 // pred_check
          %p280 = pneg %p178
        $region30: #{tpu_custom_call.1} parent=11 // pred_check_branch
          %282 = sbr.rel (%p280) target = $region32
        $region31: #{tpu_custom_call.1} parent=11 // pred_region
          _
        $region32: #{tpu_custom_call.1} parent=11 // pred_fallthru
          _
        // Predicated region
        $region33: #{tpu_custom_call.1} parent=11 // pred_check
          %p283 = pneg %p199
        $region34: #{tpu_custom_call.1} parent=11 // pred_check_branch
          %285 = sbr.rel (%p283) target = $region36
        $region35: #{tpu_custom_call.1} parent=11 // pred_region
          _
        $region36: #{tpu_custom_call.1} parent=11 // pred_fallthru
          _
      $region12: #{tpu_custom_call.1} parent=5 // pred_fallthru
        _
      %p286 = scmp.lt.s32.totalorder %s20, 2
      // Predicated region
      $region37: #{tpu_custom_call.1} parent=5 // pred_check
        %p287 = pneg %p286
      $region38: #{tpu_custom_call.1} parent=5 // pred_check_branch
        %289 = sbr.rel (%p287) target = $region40
      $region39: #{tpu_custom_call.1} parent=5 // pred_region
        // Predicated region
        $region41: #{tpu_custom_call.1} parent=39 // pred_check
          %p290 = pneg %p52
        $region42: #{tpu_custom_call.1} parent=39 // pred_check_branch
          %292 = sbr.rel (%p290) target = $region44
        $region43: #{tpu_custom_call.1} parent=39 // pred_region
          %s293 = sand.u32 %s42, 1
          %s294 = scalar_lea.sflag [#allocation4], %s293
          %s295 = sand.u32 %s42, 1
          %s296 = smul.addr %s295, 8
          %s297 = scalar_lea.vmem [#allocation3], %s296
          %s299 = ssub.s32 128, 128
          %300 = vsyncadd %s294, %s299
          %s301 = smul.addr %s27, 128
          %s302 = scalar_lea.hbm %s0, %s301
          %s304 = sshll.u32 %s297, 4
          %s305 = int_to_ptr.vmem [resolvable:$true] %s304
          %307 = dma.hbm_to_vmem [thread:$0]  %s302, 128, %s305, %s294
        $region44: #{tpu_custom_call.1} parent=39 // pred_fallthru
          _
      $region40: #{tpu_custom_call.1} parent=5 // pred_fallthru
        _
      %p308 = scmp.le.s32.totalorder 1, %s20
      %p309 = scmp.lt.s32.totalorder %s20, 3
      %p310 = pnand %p308, %p309
      %p311 = pneg %p310
      // Predicated region
      $region45: #{tpu_custom_call.1} parent=5 // pred_check
        _
      $region46: #{tpu_custom_call.1} parent=5 // pred_check_branch
        %313 = sbr.rel (%p310) target = $region48
      $region47: #{tpu_custom_call.1} parent=5 // pred_region
        %s314 = ssub.s32 %s20, 1
        %s315 = sand.u32 %s45, 1
        %s316 = scalar_lea.sflag [#allocation4], %s315
        %s317 = sand.u32 %s45, 1
        %s318 = smul.addr %s317, 8
        %s319 = scalar_lea.vmem [#allocation3], %s318
        // Predicated region
        $region49: #{tpu_custom_call.1} parent=47 // pred_check
          %p320 = pneg %p58
        $region50: #{tpu_custom_call.1} parent=47 // pred_check_branch
          %322 = sbr.rel (%p320) target = $region52
        $region51: #{tpu_custom_call.1} parent=47 // pred_region
          %323 = dma.done %s316, 128
        $region52: #{tpu_custom_call.1} parent=47 // pred_fallthru
          _
        // Predicated region
        $region53: #{tpu_custom_call.1} parent=47 // pred_check
          %p324 = pneg %p84
        $region54: #{tpu_custom_call.1} parent=47 // pred_check_branch
          %326 = sbr.rel (%p324) target = $region56
        $region55: #{tpu_custom_call.1} parent=47 // pred_region
          %327 = dma.done [#allocation7], 2048
        $region56: #{tpu_custom_call.1} parent=47 // pred_fallthru
          _
        // Predicated region
        $region57: #{tpu_custom_call.1} parent=47 // pred_check
          %p328 = pneg %p136
        $region58: #{tpu_custom_call.1} parent=47 // pred_check_branch
          %330 = sbr.rel (%p328) target = $region60
        $region59: #{tpu_custom_call.1} parent=47 // pred_region
          %331 = dma.done [#allocation7], 2048
        $region60: #{tpu_custom_call.1} parent=47 // pred_fallthru
          _
        %s332 = sand.u32 %s45, 1
        %s333 = scalar_lea.sflag [#allocation4], %s332
        %s334 = sand.u32 %s45, 1
        %s335 = smul.addr %s334, 8
        %s336 = scalar_lea.vmem [#allocation3], %s335
        %p337 = pneg %p58
        %p338 = pneg %p55
        %p339 = pneg %p84
        %p340 = pneg %p81
        %p341 = scmp.lt.s32.totalorder %s30, 0
        %s342 = scalar_select %p341, %s30, 0
        %s343 = scalar_lea.vmem %s2, %s342
        %p344 = pneg %p110
        %p345 = pneg %p107
        %p346 = pneg %p136
        %p347 = pneg %p133
        %p348 = pneg %p157
        %p349 = pneg %p154
        %p350 = pneg %p178
        %p351 = pneg %p175
        %p352 = pneg %p199
        %p353 = pneg %p196
        %p354 = pneg %p225
        %p355 = pneg %p222
        %s356 = sand.u32 %s212, 1
        %s357 = scalar_lea.sflag [#allocation5], %s356
        %s358 = sand.u32 %s212, 1
        %s359 = smul.addr %s358, 8
        %s360 = scalar_lea.vmem [#allocation9], %s359
        %p361 = scmp.lt.s32.totalorder %s30, 0
        %s362 = scalar_select %p361, %s30, 0
        %s363 = scalar_lea.vmem %s2, %s362
        %s364 = smul.u32 16, %s30
        %p365 = scmp.eq.s32.totalorder %s30, 0
        // Predicated region
        $region61: #{tpu_custom_call.1} parent=47 // pred_check
          %p366 = pneg %p365
        $region62: #{tpu_custom_call.1} parent=47 // pred_check_branch
          %368 = sbr.rel (%p366) target = $region64
        $region63: #{tpu_custom_call.1} parent=47 // pred_region
          %369 = vst [vmem:[#allocation2] sm:$0xff] 0.0
        $region64: #{tpu_custom_call.1} parent=47 // pred_fallthru
          _
        %v370 = vld [vmem:[%s319] sm:$0xff]
        %v371 = vld [vmem:[#allocation6] sm:$0xff]
        %v372 = vld [vmem:[#allocation6 + $0x8] sm:$0xff]
        %v373 = vld [vmem:[#allocation6 + $0x10] sm:$0xff]
        %v374 = vld [vmem:[#allocation6 + $0x18] sm:$0xff]
        %v375 = vld [vmem:[#allocation6 + $0x20] sm:$0xff]
        %v376 = vld [vmem:[#allocation6 + $0x28] sm:$0xff]
        %v377 = vld [vmem:[#allocation6 + $0x30] sm:$0xff]
        %v378 = vld [vmem:[#allocation6 + $0x38] sm:$0xff]
        %v379 = vld [vmem:[#allocation6 + $0x40] sm:$0xff]
        %v380 = vld [vmem:[#allocation6 + $0x48] sm:$0xff]
        %v381 = vld [vmem:[#allocation6 + $0x50] sm:$0xff]
        %v382 = vld [vmem:[#allocation6 + $0x58] sm:$0xff]
        %v383 = vld [vmem:[#allocation6 + $0x60] sm:$0xff]
        %v384 = vld [vmem:[#allocation6 + $0x68] sm:$0xff]
        %v385 = vld [vmem:[#allocation6 + $0x70] sm:$0xff]
        %v386 = vld [vmem:[#allocation6 + $0x78] sm:$0xff]
        %v387 = vld [vmem:[%s363] sm:$0x1]
        %v389 = vlaneseq
        %v390 = vshrl.u32 %v389, 7
        %v391 = vsub.s32 0, %v390
        %v392 = vrot.slane %v387, %v391
        %394 = vmatprep.subr.mxu0 0.0
        %395 = vmatpush1.msra.mxu0 %v371
        %396 = vmatprep.subr.mxu0 0.0
        %397 = vmatpush1.msra.mxu0 %v372
        %398 = vmatprep.subr.mxu0 0.0
        %399 = vmatpush1.msra.mxu0 %v373
        %400 = vmatprep.subr.mxu0 0.0
        %401 = vmatpush1.msra.mxu0 %v374
        %402 = vmatprep.subr.mxu0 0.0
        %403 = vmatpush1.msra.mxu0 %v375
        %404 = vmatprep.subr.mxu0 0.0
        %405 = vmatpush1.msra.mxu0 %v376
        %406 = vmatprep.subr.mxu0 0.0
        %407 = vmatpush1.msra.mxu0 %v377
        %408 = vmatprep.subr.mxu0 0.0
        %409 = vmatpush1.msra.mxu0 %v378
        %410 = vmatprep.subr.mxu0 0.0
        %411 = vmatpush1.msra.mxu0 %v379
        %412 = vmatprep.subr.mxu0 0.0
        %413 = vmatpush1.msra.mxu0 %v380
        %414 = vmatprep.subr.mxu0 0.0
        %415 = vmatpush1.msra.mxu0 %v381
        %416 = vmatprep.subr.mxu0 0.0
        %417 = vmatpush1.msra.mxu0 %v382
        %418 = vmatprep.subr.mxu0 0.0
        %419 = vmatpush1.msra.mxu0 %v383
        %420 = vmatprep.subr.mxu0 0.0
        %421 = vmatpush1.msra.mxu0 %v384
        %422 = vmatprep.subr.mxu0 0.0
        %423 = vmatpush1.msra.mxu0 %v385
        %424 = vmatprep.subr.mxu0 0.0
        %425 = vmatpush1.msra.mxu0 %v386
        %426 = vmatprep.subr.mxu0 0.0
        %427 = vmatpush1.msra.mxu0 0.0
        %428 = vmatprep.subr.mxu0 0.0
        %429 = vmatpush1.msra.mxu0 0.0
        %430 = vmatprep.subr.mxu0 0.0
        %431 = vmatpush1.msra.mxu0 0.0
        %432 = vmatprep.subr.mxu0 0.0
        %433 = vmatpush1.msra.mxu0 0.0
        %434 = vmatprep.subr.mxu0 0.0
        %435 = vmatpush1.msra.mxu0 0.0
        %436 = vmatprep.subr.mxu0 0.0
        %437 = vmatpush1.msra.mxu0 0.0
        %438 = vmatprep.subr.mxu0 0.0
        %439 = vmatpush1.msra.mxu0 0.0
        %440 = vmatprep.subr.mxu0 0.0
        %441 = vmatpush1.msra.mxu0 0.0
        %442 = vmatprep.subr.mxu0 0.0
        %443 = vmatpush1.msra.mxu0 0.0
        %444 = vmatprep.subr.mxu0 0.0
        %445 = vmatpush1.msra.mxu0 0.0
        %446 = vmatprep.subr.mxu0 0.0
        %447 = vmatpush1.msra.mxu0 0.0
        %448 = vmatprep.subr.mxu0 0.0
        %449 = vmatpush1.msra.mxu0 0.0
        %450 = vmatprep.subr.mxu0 0.0
        %451 = vmatpush1.msra.mxu0 0.0
        %452 = vmatprep.subr.mxu0 0.0
        %453 = vmatpush1.msra.mxu0 0.0
        %454 = vmatprep.subr.mxu0 0.0
        %455 = vmatpush1.msra.mxu0 0.0
        %456 = vmatprep.subr.mxu0 0.0
        %457 = vmatpush1.msra.mxu0 0.0
        %458 = vmatprep.mubr.f32.mxu0 0.0
        %459 = vmatmul.mubr.f32.gmra.mrb[0].mxu0 %v370
        %v460 = vpop.f32.mrb[0].mxu0
        %v461 = vadd.f32 %v392, %v460
        %v462 = vpop.f32.mrb[0].mxu0
        %463 = vdwg.mxu0
        %v464 = vmax.f32 %v461, 0.0
        %v465 = vld [vmem:[#allocation2] sm:$0xff]
        %v466 = vld [vmem:[#allocation8] sm:$0xff]
        %v467 = vld [vmem:[#allocation8 + $0x8] sm:$0xff]
        %v468 = vld [vmem:[#allocation8 + $0x10] sm:$0xff]
        %v469 = vld [vmem:[#allocation8 + $0x18] sm:$0xff]
        %v470 = vld [vmem:[#allocation8 + $0x20] sm:$0xff]
        %v471 = vld [vmem:[#allocation8 + $0x28] sm:$0xff]
        %v472 = vld [vmem:[#allocation8 + $0x30] sm:$0xff]
        %v473 = vld [vmem:[#allocation8 + $0x38] sm:$0xff]
        %v474 = vld [vmem:[#allocation8 + $0x40] sm:$0xff]
        %v475 = vld [vmem:[#allocation8 + $0x48] sm:$0xff]
        %v476 = vld [vmem:[#allocation8 + $0x50] sm:$0xff]
        %v477 = vld [vmem:[#allocation8 + $0x58] sm:$0xff]
        %v478 = vld [vmem:[#allocation8 + $0x60] sm:$0xff]
        %v479 = vld [vmem:[#allocation8 + $0x68] sm:$0xff]
        %v480 = vld [vmem:[#allocation8 + $0x70] sm:$0xff]
        %v481 = vld [vmem:[#allocation8 + $0x78] sm:$0xff]
        %482 = vmatprep.subr.mxu0 0.0
        %483 = vmatpush1.msra.mxu0 %v466
        %484 = vmatprep.subr.mxu0 0.0
        %485 = vmatpush1.msra.mxu0 %v467
        %486 = vmatprep.subr.mxu0 0.0
        %487 = vmatpush1.msra.mxu0 %v468
        %488 = vmatprep.subr.mxu0 0.0
        %489 = vmatpush1.msra.mxu0 %v469
        %490 = vmatprep.subr.mxu0 0.0
        %491 = vmatpush1.msra.mxu0 %v470
        %492 = vmatprep.subr.mxu0 0.0
        %493 = vmatpush1.msra.mxu0 %v471
        %494 = vmatprep.subr.mxu0 0.0
        %495 = vmatpush1.msra.mxu0 %v472
        %496 = vmatprep.subr.mxu0 0.0
        %497 = vmatpush1.msra.mxu0 %v473
        %498 = vmatprep.subr.mxu0 0.0
        %499 = vmatpush1.msra.mxu0 %v474
        %500 = vmatprep.subr.mxu0 0.0
        %501 = vmatpush1.msra.mxu0 %v475
        %502 = vmatprep.subr.mxu0 0.0
        %503 = vmatpush1.msra.mxu0 %v476
        %504 = vmatprep.subr.mxu0 0.0
        %505 = vmatpush1.msra.mxu0 %v477
        %506 = vmatprep.subr.mxu0 0.0
        %507 = vmatpush1.msra.mxu0 %v478
        %508 = vmatprep.subr.mxu0 0.0
        %509 = vmatpush1.msra.mxu0 %v479
        %510 = vmatprep.subr.mxu0 0.0
        %511 = vmatpush1.msra.mxu0 %v480
        %512 = vmatprep.subr.mxu0 0.0
        %513 = vmatpush1.msra.mxu0 %v481
        %514 = vmatprep.subr.mxu0 0.0
        %515 = vmatpush1.msra.mxu0 0.0
        %516 = vmatprep.subr.mxu0 0.0
        %517 = vmatpush1.msra.mxu0 0.0
        %518 = vmatprep.subr.mxu0 0.0
        %519 = vmatpush1.msra.mxu0 0.0
        %520 = vmatprep.subr.mxu0 0.0
        %521 = vmatpush1.msra.mxu0 0.0
        %522 = vmatprep.subr.mxu0 0.0
        %523 = vmatpush1.msra.mxu0 0.0
        %524 = vmatprep.subr.mxu0 0.0
        %525 = vmatpush1.msra.mxu0 0.0
        %526 = vmatprep.subr.mxu0 0.0
        %527 = vmatpush1.msra.mxu0 0.0
        %528 = vmatprep.subr.mxu0 0.0
        %529 = vmatpush1.msra.mxu0 0.0
        %530 = vmatprep.subr.mxu0 0.0
        %531 = vmatpush1.msra.mxu0 0.0
        %532 = vmatprep.subr.mxu0 0.0
        %533 = vmatpush1.msra.mxu0 0.0
        %534 = vmatprep.subr.mxu0 0.0
        %535 = vmatpush1.msra.mxu0 0.0
        %536 = vmatprep.subr.mxu0 0.0
        %537 = vmatpush1.msra.mxu0 0.0
        %538 = vmatprep.subr.mxu0 0.0
        %539 = vmatpush1.msra.mxu0 0.0
        %540 = vmatprep.subr.mxu0 0.0
        %541 = vmatpush1.msra.mxu0 0.0
        %542 = vmatprep.subr.mxu0 0.0
        %543 = vmatpush1.msra.mxu0 0.0
        %544 = vmatprep.subr.mxu0 0.0
        %545 = vmatpush1.msra.mxu0 0.0
        %546 = vmatprep.mubr.f32.mxu0 0.0
        %547 = vmatmul.mubr.f32.gmra.mrb[0].mxu0 %v464
        %v548 = vpop.f32.mrb[0].mxu0
        %v549 = vadd.f32 0.0, %v548
        %v550 = vpop.f32.mrb[0].mxu0
        %551 = vdwg.mxu0
        %v552 = vadd.f32 %v465, %v549
        %553 = vst [vmem:[#allocation2] sm:$0xff] %v552
        // Predicated region
        $region65: #{tpu_custom_call.1} parent=47 // pred_check
          %p554 = pneg %p365
        $region66: #{tpu_custom_call.1} parent=47 // pred_check_branch
          %556 = sbr.rel (%p554) target = $region68
        $region67: #{tpu_custom_call.1} parent=47 // pred_region
          %v557 = vld [vmem:[#allocation2] sm:$0xff]
          %v558 = vadd.f32 %v370, %v557
          %v559 = vld [vmem:[%s4] sm:$0x1]
          %v561 = vlaneseq
          %v562 = vshrl.u32 %v561, 7
          %v563 = vsub.s32 0, %v562
          %v564 = vrot.slane %v559, %v563
          %v566 = vadd.f32 %v558, %v564
          %567 = vadd.xlane.f32.xlu0 %v566
          %v568 = vpop.xlane.xlu0 %567
          %v569 = vmul.f32 %v568, 0.03125
          %v570 = vsub.f32 %v566, %v569
          %v571 = vlaneseq
          %v572 = vand.u32 %v571, 127
          %vm573 = vcmp.lt.s32.totalorder %v572, 32
          %v574 = vsel %vm573, 1, 0
          %vm575 = vcmp.eq.s32.totalorder %v574, 1
          %v576 = vsel %vm575, %v570, 0.0
          %v577 = vmul.f32 %v576, %v576
          %578 = vadd.xlane.f32.xlu0 %v577
          %v579 = vpop.xlane.xlu0 %578
          %v580 = vmul.f32 %v579, 0.03125
          %v581 = vadd.f32 %v580, 1e-05
          %v582 = vrsqrt.pop %v581
          %v583 = vmul.f32 %v576, %v582
          %v584 = vld [vmem:[%s5] sm:$0x1]
          %v586 = vlaneseq
          %v587 = vshrl.u32 %v586, 7
          %v588 = vsub.s32 0, %v587
          %v589 = vrot.slane %v584, %v588
          %v591 = vmul.f32 %v583, %v589
          %v592 = vld [vmem:[%s6] sm:$0x1]
          %v594 = vlaneseq
          %v595 = vshrl.u32 %v594, 7
          %v596 = vsub.s32 0, %v595
          %v597 = vrot.slane %v592, %v596
          %v599 = vadd.f32 %v591, %v597
          %600 = vst [vmem:[%s360] sm:$0xff] %v599
        $region68: #{tpu_custom_call.1} parent=47 // pred_fallthru
          _
        %s601 = sand.u32 %s212, 1
        %s602 = scalar_lea.sflag [#allocation5], %s601
        %s603 = sand.u32 %s212, 1
        %s604 = smul.addr %s603, 8
        %s605 = scalar_lea.vmem [#allocation9], %s604
        // Predicated region
        $region69: #{tpu_custom_call.1} parent=47 // pred_check
          %p606 = pneg %p222
        $region70: #{tpu_custom_call.1} parent=47 // pred_check_branch
          %608 = sbr.rel (%p606) target = $region72
        $region71: #{tpu_custom_call.1} parent=47 // pred_region
          %s610 = ssub.s32 128, 128
          %611 = vsyncadd %s602, %s610
          %s612 = smul.addr %s29, 128
          %s613 = scalar_lea.hbm %s7, %s612
          %s615 = sshll.u32 %s605, 4
          %s616 = int_to_ptr.vmem [resolvable:$true] %s615
          %618 = dma.vmem_to_hbm [thread:$0]  %s616, 128, %s613, %s602
        $region72: #{tpu_custom_call.1} parent=47 // pred_fallthru
          _
      $region48: #{tpu_custom_call.1} parent=5 // pred_fallthru
        _
      %p619 = scmp.le.s32.totalorder 2, %s20
      // Predicated region
      $region73: #{tpu_custom_call.1} parent=5 // pred_check
        %p620 = pneg %p619
      $region74: #{tpu_custom_call.1} parent=5 // pred_check_branch
        %622 = sbr.rel (%p620) target = $region76
      $region75: #{tpu_custom_call.1} parent=5 // pred_region
        %s623 = ssub.s32 %s20, 2
        // Predicated region
        $region77: #{tpu_custom_call.1} parent=75 // pred_check
          %p624 = pneg %p228
        $region78: #{tpu_custom_call.1} parent=75 // pred_check_branch
          %626 = sbr.rel (%p624) target = $region80
        $region79: #{tpu_custom_call.1} parent=75 // pred_region
          %s627 = sand.u32 %s213, 1
          %s628 = scalar_lea.sflag [#allocation5], %s627
          %s629 = sand.u32 %s213, 1
          %s630 = smul.addr %s629, 8
          %s631 = scalar_lea.vmem [#allocation9], %s630
          %632 = dma.done %s628, 128
        $region80: #{tpu_custom_call.1} parent=75 // pred_fallthru
          _
      $region76: #{tpu_custom_call.1} parent=5 // pred_fallthru
        _
    $region6: #{tpu_custom_call.1} parent=1 // loop_footer
      %s24 = sadd.s32 1, %s20
    $region7: #{tpu_custom_call.1} parent=1 // loop_footer_branch
      %19 = sbr.rel target = $region3
    $region8: #{tpu_custom_call.1} parent=1 // loop_exit
      _
    %633 = vsyncpa [#allocation4], 1
    %s634 = scalar_lea.sflag [#allocation4], 1
    %635 = vsyncpa %s634, 1
    %636 = vsyncpa [#allocation7], 1
    %637 = vsyncpa [#allocation5], 1
    %s638 = scalar_lea.sflag [#allocation5], 1
    %639 = vsyncpa %s638, 1

</llo_original>
